<compile_context>
chip_gen: v7x
topology: tpu7x:2x2x1
jax: 0.10.0
libtpu: 0.0.40
codegen_flags: <defaults>
</compile_context>

<pallas_src>
import functools

import jax
import jax.numpy as jnp
from jax.experimental import pallas as pl
from jax.experimental.pallas import tpu as pltpu

_VMEM_LIMIT = 48 * 1024 * 1024          # scoped VMEM limit (safe on v5e/v6e/v7x)
_TILE_VMEM_BUDGET = 32 * 1024 * 1024    # budget used to size the M tiles


# ------------------------------ small helpers ------------------------------

def _round_up(x, m):
    return ((x + m - 1) // m) * m


def _cdiv(a, b):
    return (a + b - 1) // b


def _choose_tiling(m_rows, k, nout, in_itemsize, *, min_steps=2):
    """Pick (tm, grid, m_padded) for an (M,K)@(K,Nout) matmul tiled over M.

    Tiles are multiples of 16 rows (bf16 sublane packing), sized against a
    VMEM budget, and we keep >=2 grid steps when possible so both TensorCores
    get work on v7x megacore.
    """
    mp = _round_up(m_rows, 16)
    weight_bytes = 2 * k * nout * 2                 # bf16 weight, double-buffered
    row_bytes = 2 * (k * in_itemsize + nout * 4)    # in + f32 out rows, x2 buffers
    budget = max(_TILE_VMEM_BUDGET - weight_bytes, 16 * row_bytes)
    cap_rows = max(16, min(1024, (budget // row_bytes) // 16 * 16))
    steps = _cdiv(mp, cap_rows)
    if mp >= 16 * min_steps:
        steps = max(steps, min_steps)
    tm = _round_up(_cdiv(mp, steps), 16)
    grid = _cdiv(mp, tm)
    return tm, grid, tm * grid


# ----------------------------- Pallas kernel --------------------------------

def _matmul_kernel(x_ref, w_ref, o_ref, *, tanh_out):
    # bf16 operands, f32 MXU accumulation; optional fused tanh epilogue (EUP).
    acc = jnp.dot(x_ref[...].astype(jnp.bfloat16), w_ref[...],
                  preferred_element_type=jnp.float32)
    if tanh_out:
        acc = jnp.tanh(acc)
    o_ref[...] = acc


def pallas_matmul(x2, w_bf16, *, tanh_out=False):
    """Tiled (M, K) @ (K, Nout) -> (M, Nout) f32, grid over M only."""
    m, k = x2.shape
    k2, nout = w_bf16.shape
    assert k == k2
    tm, grid, mpad = _choose_tiling(m, k, nout, x2.dtype.itemsize)
    if mpad != m:
        x2 = jnp.pad(x2, ((0, mpad - m), (0, 0)))
    # NOTE: the weight BlockSpec has a constant index_map, so Pallas keeps it
    # resident across grid steps (no per-step re-DMA).
    # TODO(synk): pipeline_mode=pl.Buffered(1) on the weight spec would also
    # drop its second buffer; skipped to keep lowering conservative.
    out = pl.pallas_call(
        functools.partial(_matmul_kernel, tanh_out=tanh_out),
        grid=(grid,),
        in_specs=[pl.BlockSpec((tm, k), lambda i: (i, 0)),
                  pl.BlockSpec((k, nout), lambda i: (0, 0))],
        out_specs=pl.BlockSpec((tm, nout), lambda i: (i, 0)),
        out_shape=jax.ShapeDtypeStruct((mpad, nout), jnp.float32),
        compiler_params=pltpu.CompilerParams(
            dimension_semantics=("parallel",),
            vmem_limit_bytes=_VMEM_LIMIT),
    )(x2, w_bf16)
    return out[:m] if mpad != m else out


# ------------------- phase-grouped ConvTranspose2d glue ---------------------

def _prep_phase_weight(weight, stride):
    """PyTorch (Cin, Cout, kH, kW) -> bf16 (q*q*Cin, s*s*Cout_pad).

    Row index  = (qh*q + qw)*Cin + cin        (input taps, concatenated on K)
    Col index  = (ph*s + pw)*Cout_pad + cout  (output stride phases on lanes)
    with kernel tap (i, j) = (s*qh + ph, s*qw + pw).
    Cout is padded (not the flattened axis) so every phase group stays aligned
    and the total output width is a multiple of 128 (lane-dense stores).
    """
    cin, cout, kh, kw = weight.shape
    s = stride
    assert kh % s == 0 and kw % s == 0, "phase-grouped deconv needs k % stride == 0"
    q = kh // s
    cout_p = _round_up(cout, max(1, 128 // (s * s)))
    w = weight.reshape(cin, cout, q, s, q, s)            # (cin,cout,qh,ph,qw,pw)
    w = jnp.transpose(w, (2, 4, 0, 3, 5, 1))             # (qh,qw,cin,ph,pw,cout)
    w = jnp.pad(w, ((0, 0),) * 5 + ((0, cout_p - cout),))
    w = w.reshape(q * q * cin, s * s * cout_p)
    return w.astype(jnp.bfloat16), q, cout_p


def _build_taps(y, q):
    """(N,H,W,C) -> (N, H+q-1, W+q-1, q*q*C): zero-padded shifted copies.

    Cheap jnp pad+concat on the (small) layer input; XLA fuses the preceding
    BN affine + ReLU into this producer, so there is no extra HBM pass.
    """
    taps = []
    for qh in range(q):
        for qw in range(q):
            taps.append(jnp.pad(
                y, ((0, 0), (qh, q - 1 - qh), (qw, q - 1 - qw), (0, 0))))
    return jnp.concatenate(taps, axis=-1)


def conv_transpose2d_phase(y, weight, stride, padding, *, tanh_out=False):
    """ConvTranspose2d (NHWC) via a single phase-grouped Pallas matmul.

    The matmul output already holds one value per output pixel (phases stacked
    on the channel axis); only an interleave-reshape + crop remains in XLA.
    """
    n, h, w, cin = y.shape
    _, cout, kh, kw = weight.shape
    wm, q, cout_p = _prep_phase_weight(weight, stride)
    s = stride
    ph_, pw_ = h + q - 1, w + q - 1

    taps = _build_taps(y.astype(jnp.bfloat16), q)          # bf16 halves DMA bytes
    taps = taps.reshape(n * ph_ * pw_, q * q * cin)
    out = pallas_matmul(taps, wm, tanh_out=tanh_out)        # (M', s*s*cout_p) f32

    # TODO(synk): the interleave below could be folded into the kernel's output
    # BlockSpec by tiling over (n, a, b) blocks; kept as one XLA transpose-copy.
    out = out.reshape(n, ph_, pw_, s, s, cout_p)
    out = jnp.transpose(out, (0, 1, 3, 2, 4, 5)).reshape(n, s * ph_, s * pw_, cout_p)
    hout = (h - 1) * s + kh - 2 * padding
    wout = (w - 1) * s + kw - 2 * padding
    return out[:, padding:padding + hout, padding:padding + wout, :cout]


def conv_transpose2d_1x1_input(x, weight):
    """First layer: stride=1, padding=0 on a 1x1 spatial input (M = batch).

    M is tiny (a couple of rows) so a pallas_call launch would dwarf the FLOPs;
    plain jnp.einsum per the perf review.
    """
    n, _, _, cin = x.shape
    return jnp.einsum('nc,cohw->nhwo', x.reshape(n, cin), weight)


def batchnorm_relu(x, gamma, beta, eps=1e-5):
    """Training-mode BatchNorm (biased batch variance, two-pass) + ReLU.

    Plain jnp: XLA fuses the stats + affine + ReLU into the tap-concat that
    feeds the next Pallas matmul, so no extra standalone reduction kernel.
    """
    mean = jnp.mean(x, axis=(0, 1, 2), keepdims=True)
    var = jnp.mean(jnp.square(x - mean), axis=(0, 1, 2), keepdims=True)
    y = (x - mean) * jax.lax.rsqrt(var + eps)
    y = y * gamma.reshape(1, 1, 1, -1) + beta.reshape(1, 1, 1, -1)
    return jnp.maximum(y, 0.0)


# ------------------------------- DC_Generator -------------------------------

def init_params(key, ngf=16, nz=100):
    """DCGAN-style init: conv ~ N(0, 0.02), BN gamma ~ N(1, 0.02), beta = 0."""
    chans = [nz, ngf * 8, ngf * 4, ngf * 2, ngf, 3]
    params = {}
    for i in range(5):
        key, kw, kg = jax.random.split(key, 3)
        cin, cout = chans[i], chans[i + 1]
        params[f"w{i + 1}"] = 0.02 * jax.random.normal(
            kw, (cin, cout, 4, 4), jnp.float32)
        if i < 4:  # BN follows the first 4 deconvs only
            params[f"g{i + 1}"] = 1.0 + 0.02 * jax.random.normal(
                kg, (cout,), jnp.float32)
            params[f"b{i + 1}"] = jnp.zeros((cout,), jnp.float32)
    return params


def dc_generator_forward(x_nchw, params):
    x = jnp.transpose(x_nchw, (0, 2, 3, 1)).astype(jnp.float32)        # NHWC
    x = conv_transpose2d_1x1_input(x, params["w1"])                    # 1 -> 4
    x = batchnorm_relu(x, params["g1"], params["b1"])
    x = conv_transpose2d_phase(x, params["w2"], 2, 1)                  # 4 -> 8
    x = batchnorm_relu(x, params["g2"], params["b2"])
    x = conv_transpose2d_phase(x, params["w3"], 2, 1)                  # 8 -> 16
    x = batchnorm_relu(x, params["g3"], params["b3"])
    x = conv_transpose2d_phase(x, params["w4"], 2, 1)                  # 16 -> 32
    x = batchnorm_relu(x, params["g4"], params["b4"])
    x = conv_transpose2d_phase(x, params["w5"], 2, 1, tanh_out=True)   # 32 -> 64
    return jnp.transpose(x, (0, 3, 1, 2))                              # NCHW


if __name__ == "__main__":
    key = jax.random.PRNGKey(0)
    kp, kx = jax.random.split(key)
    ngf = 16                      # small ngf for the test (module default is 64)
    params = init_params(kp, ngf=ngf, nz=100)
    z = jax.random.normal(kx, (2, 100, 1, 1), jnp.float32)   # NCHW latent

    fwd = jax.jit(dc_generator_forward)
    out = fwd(z, params)
    jax.block_until_ready(out)
    assert out.shape == (2, 3, 64, 64), out.shape
    assert bool(jnp.all(jnp.isfinite(out)))
    print("KERNEL_OK")
</pallas_src>

<mosaic_0001>
module attributes {stable_mosaic.version = 11 : i64} {
  func.func @_matmul_kernel(%arg0: i32, %arg1: memref<32x512xbf16, #tpu.memory_space<vmem>>, %arg2: memref<512x256xbf16, #tpu.memory_space<vmem>>, %arg3: memref<32x256xf32, #tpu.memory_space<vmem>>) attributes {dimension_semantics = [#tpu.dimension_semantics<parallel>], iteration_bounds = array<i64: 2>, scalar_prefetch = 0 : i64, scratch_operands = 0 : i64, tpu.core_type = #tpu.core_type<tc>, window_params = [{transform_indices = @transform_0, window_bounds = array<i64: 32, 512>}, {pipeline_mode = #tpu.pipeline_mode<synchronous>, transform_indices = @transform_1, window_bounds = array<i64: 512, 256>}, {transform_indices = @transform_2, window_bounds = array<i64: 32, 256>}]} {
    %c0 = arith.constant 0 : index
    %c0_0 = arith.constant 0 : index
    %0 = vector.load %arg1[%c0, %c0_0] : memref<32x512xbf16, #tpu.memory_space<vmem>>, vector<32x512xbf16>
    %c0_1 = arith.constant 0 : index
    %c0_2 = arith.constant 0 : index
    %1 = vector.load %arg2[%c0_1, %c0_2] : memref<512x256xbf16, #tpu.memory_space<vmem>>, vector<512x256xbf16>
    %cst = arith.constant dense<0.000000e+00> : vector<32x256xf32>
    %2 = tpu.matmul %0, %1, %cst {dimension_numbers = #tpu.dot_dimension_numbers<[1], [0], [0], [1], [0, 0, 1, 1], [], []>} : vector<32x512xbf16>, vector<512x256xbf16>, vector<32x256xf32> -> vector<32x256xf32>
    %c0_3 = arith.constant 0 : index
    %c0_4 = arith.constant 0 : index
    %3 = vector.load %arg3[%c0_3, %c0_4] : memref<32x256xf32, #tpu.memory_space<vmem>>, vector<32x256xf32>
    tpu.vector_store %arg3[%c0_3, %c0_4], %2 {strides = array<i32>} : memref<32x256xf32, #tpu.memory_space<vmem>>, vector<32x256xf32>,
    return
  }
  func.func @transform_0(%arg0: i32) -> (i32, i32) {
    %c0_i32 = arith.constant 0 : i32
    %c0_i32_0 = arith.constant 0 : i32
    return %arg0, %c0_i32 : i32, i32
  }
  func.func @transform_1(%arg0: i32) -> (i32, i32) {
    %c0_i32 = arith.constant 0 : i32
    %c0_i32_0 = arith.constant 0 : i32
    %c0_i32_1 = arith.constant 0 : i32
    return %c0_i32, %c0_i32_0 : i32, i32
  }
  func.func @transform_2(%arg0: i32) -> (i32, i32) {
    %c0_i32 = arith.constant 0 : i32
    %c0_i32_0 = arith.constant 0 : i32
    return %arg0, %c0_i32 : i32, i32
  }
}

module attributes {stable_mosaic.version = 11 : i64} {
  func.func @_matmul_kernel(%arg0: i32, %arg1: memref<96x256xbf16, #tpu.memory_space<vmem>>, %arg2: memref<256x128xbf16, #tpu.memory_space<vmem>>, %arg3: memref<96x128xf32, #tpu.memory_space<vmem>>) attributes {dimension_semantics = [#tpu.dimension_semantics<parallel>], iteration_bounds = array<i64: 2>, scalar_prefetch = 0 : i64, scratch_operands = 0 : i64, tpu.core_type = #tpu.core_type<tc>, window_params = [{transform_indices = @transform_0, window_bounds = array<i64: 96, 256>}, {pipeline_mode = #tpu.pipeline_mode<synchronous>, transform_indices = @transform_1, window_bounds = array<i64: 256, 128>}, {transform_indices = @transform_2, window_bounds = array<i64: 96, 128>}]} {
    %c0 = arith.constant 0 : index
    %c0_0 = arith.constant 0 : index
    %0 = vector.load %arg1[%c0, %c0_0] : memref<96x256xbf16, #tpu.memory_space<vmem>>, vector<96x256xbf16>
    %c0_1 = arith.constant 0 : index
    %c0_2 = arith.constant 0 : index
    %1 = vector.load %arg2[%c0_1, %c0_2] : memref<256x128xbf16, #tpu.memory_space<vmem>>, vector<256x128xbf16>
    %cst = arith.constant dense<0.000000e+00> : vector<96x128xf32>
    %2 = tpu.matmul %0, %1, %cst {dimension_numbers = #tpu.dot_dimension_numbers<[1], [0], [0], [1], [0, 0, 1, 1], [], []>} : vector<96x256xbf16>, vector<256x128xbf16>, vector<96x128xf32> -> vector<96x128xf32>
    %c0_3 = arith.constant 0 : index
    %c0_4 = arith.constant 0 : index
    %3 = vector.load %arg3[%c0_3, %c0_4] : memref<96x128xf32, #tpu.memory_space<vmem>>, vector<96x128xf32>
    tpu.vector_store %arg3[%c0_3, %c0_4], %2 {strides = array<i32>} : memref<96x128xf32, #tpu.memory_space<vmem>>, vector<96x128xf32>,
    return
  }
  func.func @transform_0(%arg0: i32) -> (i32, i32) {
    %c0_i32 = arith.constant 0 : i32
    %c0_i32_0 = arith.constant 0 : i32
    return %arg0, %c0_i32 : i32, i32
  }
  func.func @transform_1(%arg0: i32) -> (i32, i32) {
    %c0_i32 = arith.constant 0 : i32
    %c0_i32_0 = arith.constant 0 : i32
    %c0_i32_1 = arith.constant 0 : i32
    return %c0_i32, %c0_i32_0 : i32, i32
  }
  func.func @transform_2(%arg0: i32) -> (i32, i32) {
    %c0_i32 = arith.constant 0 : i32
    %c0_i32_0 = arith.constant 0 : i32
    return %arg0, %c0_i32 : i32, i32
  }
}

module attributes {stable_mosaic.version = 11 : i64} {
  func.func @_matmul_kernel(%arg0: i32, %arg1: memref<304x128xbf16, #tpu.memory_space<vmem>>, %arg2: memref<128x128xbf16, #tpu.memory_space<vmem>>, %arg3: memref<304x128xf32, #tpu.memory_space<vmem>>) attributes {dimension_semantics = [#tpu.dimension_semantics<parallel>], iteration_bounds = array<i64: 2>, scalar_prefetch = 0 : i64, scratch_operands = 0 : i64, tpu.core_type = #tpu.core_type<tc>, window_params = [{transform_indices = @transform_0, window_bounds = array<i64: 304, 128>}, {pipeline_mode = #tpu.pipeline_mode<synchronous>, transform_indices = @transform_1, window_bounds = array<i64: 128, 128>}, {transform_indices = @transform_2, window_bounds = array<i64: 304, 128>}]} {
    %c0 = arith.constant 0 : index
    %c0_0 = arith.constant 0 : index
    %0 = vector.load %arg1[%c0, %c0_0] : memref<304x128xbf16, #tpu.memory_space<vmem>>, vector<304x128xbf16>
    %c0_1 = arith.constant 0 : index
    %c0_2 = arith.constant 0 : index
    %1 = vector.load %arg2[%c0_1, %c0_2] : memref<128x128xbf16, #tpu.memory_space<vmem>>, vector<128x128xbf16>
    %cst = arith.constant dense<0.000000e+00> : vector<304x128xf32>
    %2 = tpu.matmul %0, %1, %cst {dimension_numbers = #tpu.dot_dimension_numbers<[1], [0], [0], [1], [0, 0, 1, 1], [], []>} : vector<304x128xbf16>, vector<128x128xbf16>, vector<304x128xf32> -> vector<304x128xf32>
    %c0_3 = arith.constant 0 : index
    %c0_4 = arith.constant 0 : index
    %3 = vector.load %arg3[%c0_3, %c0_4] : memref<304x128xf32, #tpu.memory_space<vmem>>, vector<304x128xf32>
    tpu.vector_store %arg3[%c0_3, %c0_4], %2 {strides = array<i32>} : memref<304x128xf32, #tpu.memory_space<vmem>>, vector<304x128xf32>,
    return
  }
  func.func @transform_0(%arg0: i32) -> (i32, i32) {
    %c0_i32 = arith.constant 0 : i32
    %c0_i32_0 = arith.constant 0 : i32
    return %arg0, %c0_i32 : i32, i32
  }
  func.func @transform_1(%arg0: i32) -> (i32, i32) {
    %c0_i32 = arith.constant 0 : i32
    %c0_i32_0 = arith.constant 0 : i32
    %c0_i32_1 = arith.constant 0 : i32
    return %c0_i32, %c0_i32_0 : i32, i32
  }
  func.func @transform_2(%arg0: i32) -> (i32, i32) {
    %c0_i32 = arith.constant 0 : i32
    %c0_i32_0 = arith.constant 0 : i32
    return %arg0, %c0_i32 : i32, i32
  }
}

module attributes {stable_mosaic.version = 11 : i64} {
  func.func @_matmul_kernel(%arg0: i32, %arg1: memref<736x64xbf16, #tpu.memory_space<vmem>>, %arg2: memref<64x128xbf16, #tpu.memory_space<vmem>>, %arg3: memref<736x128xf32, #tpu.memory_space<vmem>>) attributes {dimension_semantics = [#tpu.dimension_semantics<parallel>], iteration_bounds = array<i64: 3>, scalar_prefetch = 0 : i64, scratch_operands = 0 : i64, tpu.core_type = #tpu.core_type<tc>, window_params = [{transform_indices = @transform_0, window_bounds = array<i64: 736, 64>}, {pipeline_mode = #tpu.pipeline_mode<synchronous>, transform_indices = @transform_1, window_bounds = array<i64: 64, 128>}, {transform_indices = @transform_2, window_bounds = array<i64: 736, 128>}]} {
    %c0 = arith.constant 0 : index
    %c0_0 = arith.constant 0 : index
    %0 = vector.load %arg1[%c0, %c0_0] : memref<736x64xbf16, #tpu.memory_space<vmem>>, vector<736x64xbf16>
    %c0_1 = arith.constant 0 : index
    %c0_2 = arith.constant 0 : index
    %1 = vector.load %arg2[%c0_1, %c0_2] : memref<64x128xbf16, #tpu.memory_space<vmem>>, vector<64x128xbf16>
    %cst = arith.constant dense<0.000000e+00> : vector<736x128xf32>
    %2 = tpu.matmul %0, %1, %cst {dimension_numbers = #tpu.dot_dimension_numbers<[1], [0], [0], [1], [0, 0, 1, 1], [], []>} : vector<736x64xbf16>, vector<64x128xbf16>, vector<736x128xf32> -> vector<736x128xf32>
    %3 = math.tanh %2 : vector<736x128xf32>
    %c0_3 = arith.constant 0 : index
    %c0_4 = arith.constant 0 : index
    %4 = vector.load %arg3[%c0_3, %c0_4] : memref<736x128xf32, #tpu.memory_space<vmem>>, vector<736x128xf32>
    tpu.vector_store %arg3[%c0_3, %c0_4], %3 {strides = array<i32>} : memref<736x128xf32, #tpu.memory_space<vmem>>, vector<736x128xf32>,
    return
  }
  func.func @transform_0(%arg0: i32) -> (i32, i32) {
    %c0_i32 = arith.constant 0 : i32
    %c0_i32_0 = arith.constant 0 : i32
    return %arg0, %c0_i32 : i32, i32
  }
  func.func @transform_1(%arg0: i32) -> (i32, i32) {
    %c0_i32 = arith.constant 0 : i32
    %c0_i32_0 = arith.constant 0 : i32
    %c0_i32_1 = arith.constant 0 : i32
    return %c0_i32, %c0_i32_0 : i32, i32
  }
  func.func @transform_2(%arg0: i32) -> (i32, i32) {
    %c0_i32 = arith.constant 0 : i32
    %c0_i32_0 = arith.constant 0 : i32
    return %arg0, %c0_i32 : i32, i32
  }
}

</mosaic_0001>

<llo_original>
// kernel: dc_generator_forward.4
$region0: #{dc_generator_forward.4}
  #allocation0 [shape = 'u32[]', space=smem, size = 0x4, offset = 0x4, fixed_abs, tag = 'smem constant byte address 0x4 - core index']
  #allocation1 [shape = 'u32[144,128]{1,0:T(1,128)}', space=vmem, size = 0x12000, scoped, tag = 'internal scratch']
  %s0 = inlined_call_operand.vmem [shape: bf16[64,512], index: 0, kind: input, shape index: {}]
  %s1 = inlined_call_operand.vmem [shape: bf16[512,256], index: 1, kind: input, shape index: {}]
  %s2 = inlined_call_operand.vmem [shape: f32[64,256], index: 2, kind: output, shape index: {}]
  %s3 = sld [smem:[#allocation0]]
  $region41: #{dc_generator_forward.4} parent=0
    _
  %s5 = ssub.s32 1, %s3
  %s6 = scalar_select 0, %s5, %s3
  loop: start=0, step=1, limit=4
  $region2: #{dc_generator_forward.4} parent=0 // loop_pre_header
    _
  $region3: #{dc_generator_forward.4} parent=0 // loop_header
    %s8 = sphi 0, %s12
    %p9 = scmp.ge.s32.totalorder %s8, 4
    %s18 = sphi 0, %s20
    %s21 = sphi 0, %s18
    %s22 = sphi 0, %s21
    %s38 = sphi 0, %s22
    %s42 = sphi 0, %s42
    %s44 = sphi 0, %s42
    %s45 = sphi 0, %s44
    %s59 = sphi 0, %s45
    %s65 = sphi 0, %s67
    %s68 = sphi 0, %s65
    %s69 = sphi 0, %s68
    %s85 = sphi 0, %s69
  $region4: #{dc_generator_forward.4} parent=0 // loop_header_branch
    %11 = sbr.rel (%p9) target = $region8
  $region5: #{dc_generator_forward.4} parent=0 // loop_body
    %s13 = ssub.s32 %s8, 1
    %s14 = ssub.s32 %s8, 2
    %s15 = sadd.s32 %s8, 1
    %s16 = ssub.s32 %s8, %s15
    %p17 = scmp.eq.s32.totalorder %s16, 0
    %s19 = sadd.s32 %s18, 1
    %s20 = scalar_select %p17, %s18, %s19
    %p23 = pneg %p17
    %p24 = scmp.eq.s32.totalorder %s8, 1
    %p25 = por %p23, %p24
    %p26 = scmp.ne.s32.totalorder %s18, %s21
    %p27 = scmp.eq.s32.totalorder %s8, 0
    %p28 = por %p26, %p27
    %p29 = scmp.ne.s32.totalorder %s18, %s21
    %p30 = scmp.eq.s32.totalorder %s13, 1
    %p31 = por %p29, %p30
    %p32 = scmp.ne.s32.totalorder %s21, %s22
    %p33 = scmp.eq.s32.totalorder %s13, 0
    %p34 = por %p32, %p33
    %p35 = scmp.ne.s32.totalorder %s21, %s22
    %p36 = scmp.eq.s32.totalorder %s14, 1
    %p37 = por %p35, %p36
    %p39 = scmp.ne.s32.totalorder %s22, %s38
    %p40 = scmp.eq.s32.totalorder %s14, 0
    %p41 = por %p39, %p40
    %s43 = sadd.s32 %s42, 1
    %p46 = scmp.eq.s32.totalorder %s8, 1
    %p47 = scmp.ne.s32.totalorder %s42, %s44
    %p48 = scmp.eq.s32.totalorder %s8, 0
    %p49 = por %p47, %p48
    %p50 = scmp.ne.s32.totalorder %s42, %s44
    %p51 = scmp.eq.s32.totalorder %s13, 1
    %p52 = por %p50, %p51
    %p53 = scmp.ne.s32.totalorder %s44, %s45
    %p54 = scmp.eq.s32.totalorder %s13, 0
    %p55 = por %p53, %p54
    %p56 = scmp.ne.s32.totalorder %s44, %s45
    %p57 = scmp.eq.s32.totalorder %s14, 1
    %p58 = por %p56, %p57
    %p60 = scmp.ne.s32.totalorder %s45, %s59
    %p61 = scmp.eq.s32.totalorder %s14, 0
    %p62 = por %p60, %p61
    %s63 = ssub.s32 %s8, %s15
    %p64 = scmp.eq.s32.totalorder %s63, 0
    %s66 = sadd.s32 %s65, 1
    %s67 = scalar_select %p64, %s65, %s66
    %p70 = pneg %p64
    %p71 = scmp.eq.s32.totalorder %s8, 1
    %p72 = por %p70, %p71
    %p73 = scmp.ne.s32.totalorder %s65, %s68
    %p74 = scmp.eq.s32.totalorder %s8, 0
    %p75 = por %p73, %p74
    %p76 = scmp.ne.s32.totalorder %s65, %s68
    %p77 = scmp.eq.s32.totalorder %s13, 1
    %p78 = por %p76, %p77
    %p79 = scmp.ne.s32.totalorder %s68, %s69
    %p80 = scmp.eq.s32.totalorder %s13, 0
    %p81 = por %p79, %p80
    %p82 = scmp.ne.s32.totalorder %s68, %s69
    %p83 = scmp.eq.s32.totalorder %s14, 1
    %p84 = por %p82, %p83
    %p86 = scmp.ne.s32.totalorder %s69, %s85
    %p87 = scmp.eq.s32.totalorder %s14, 0
    %p88 = por %p86, %p87
    %p89 = scmp.le.s32.totalorder 1, %s8
    %p90 = scmp.lt.s32.totalorder %s8, 3
    %p91 = pnand %p89, %p90
    %p92 = pneg %p91
    // Predicated region
    $region9: #{dc_generator_forward.4} parent=5 // pred_check
      _
    $region10: #{dc_generator_forward.4} parent=5 // pred_check_branch
      %94 = sbr.rel (%p91) target = $region12
    $region11: #{dc_generator_forward.4} parent=5 // pred_region
      %s95 = ssub.s32 %s8, 1
      // Predicated region
      $region13: #{dc_generator_forward.4} parent=11 // pred_check
        %p96 = pneg %p55
      $region14: #{dc_generator_forward.4} parent=11 // pred_check_branch
        %98 = sbr.rel (%p96) target = $region16
      $region15: #{dc_generator_forward.4} parent=11 // pred_region
        _
      $region16: #{dc_generator_forward.4} parent=11 // pred_fallthru
        _
    $region12: #{dc_generator_forward.4} parent=5 // pred_fallthru
      _
    %p99 = scmp.lt.s32.totalorder %s8, 2
    // Predicated region
    $region17: #{dc_generator_forward.4} parent=5 // pred_check
      %p100 = pneg %p99
    $region18: #{dc_generator_forward.4} parent=5 // pred_check_branch
      %102 = sbr.rel (%p100) target = $region20
    $region19: #{dc_generator_forward.4} parent=5 // pred_region
      // Predicated region
      $region21: #{dc_generator_forward.4} parent=19 // pred_check
        %p103 = pneg %p28
      $region22: #{dc_generator_forward.4} parent=19 // pred_check_branch
        %105 = sbr.rel (%p103) target = $region24
      $region23: #{dc_generator_forward.4} parent=19 // pred_region
        %s106 = smul.u32 4, %s8
        %p107 = scmp.lt.s32.totalorder %s106, 7
        %s108 = scalar_select %p107, %s106, 7
        %s109 = smul.addr %s108, 4
        %s110 = smul.addr %s109, 4
        %s111 = scalar_lea.vmem %s0, %s110
        %s112 = smul.u32 4, %s8
      $region24: #{dc_generator_forward.4} parent=19 // pred_fallthru
        _
    $region20: #{dc_generator_forward.4} parent=5 // pred_fallthru
      _
    %p113 = scmp.le.s32.totalorder 1, %s8
    %p114 = scmp.lt.s32.totalorder %s8, 3
    %p115 = pnand %p113, %p114
    %p116 = pneg %p115
    // Predicated region
    $region25: #{dc_generator_forward.4} parent=5 // pred_check
      _
    $region26: #{dc_generator_forward.4} parent=5 // pred_check_branch
      %118 = sbr.rel (%p115) target = $region28
    $region27: #{dc_generator_forward.4} parent=5 // pred_region
      %s119 = ssub.s32 %s8, 1
      %s120 = smul.u32 4, %s13
      %p121 = scmp.lt.s32.totalorder %s120, 7
      %s122 = scalar_select %p121, %s120, 7
      %s123 = smul.addr %s122, 4
      %s124 = smul.addr %s123, 4
      %s125 = scalar_lea.vmem %s0, %s124
      %p126 = pneg %p34
      %p127 = pneg %p31
      %p128 = pneg %p55
      %p129 = pneg %p52
      %p130 = pneg %p81
      %p131 = pneg %p78
      %s132 = smul.u32 4, %s13
      %p133 = scmp.lt.s32.totalorder %s132, 7
      %s134 = scalar_select %p133, %s132, 7
      %s135 = smul.addr %s134, 2
      %s136 = smul.addr %s135, 8
      %s137 = scalar_lea.vmem %s2, %s136
      %s138 = smul.u32 4, %s13
      %p139 = scmp.lt.s32.totalorder %s138, 7
      %s140 = scalar_select %p139, %s138, 7
      %s141 = smul.addr %s140, 4
      %s142 = smul.addr %s141, 4
      %s143 = scalar_lea.vmem %s0, %s142
      %s144 = smul.u32 4, %s13
      %s145 = smul.u32 4, %s13
      %p146 = scmp.lt.s32.totalorder %s145, 7
      %s147 = scalar_select %p146, %s145, 7
      %s148 = smul.addr %s147, 2
      %s149 = smul.addr %s148, 8
      %s150 = scalar_lea.vmem %s2, %s149
      %s151 = smul.u32 4, %s13
      %v152 = vld [vmem:[%s143] sm:$0xff]
      %v153 = vld [vmem:[%s143 + $0x8] sm:$0xff]
      %v154 = vld [vmem:[%s143 + $0x10] sm:$0xff]
      %v155 = vld [vmem:[%s143 + $0x18] sm:$0xff]
      %v156 = vld [vmem:[%s143 + $0x20] sm:$0xff]
      %v157 = vld [vmem:[%s143 + $0x28] sm:$0xff]
      %v158 = vld [vmem:[%s143 + $0x30] sm:$0xff]
      %v159 = vld [vmem:[%s143 + $0x38] sm:$0xff]
      %v160 = vld [vmem:[%s1] sm:$0xff]
      %v161 = vld [vmem:[%s1 + $0x8] sm:$0xff]
      %v162 = vld [vmem:[%s1 + $0x10] sm:$0xff]
      %v163 = vld [vmem:[%s1 + $0x18] sm:$0xff]
      %v164 = vld [vmem:[%s1 + $0x20] sm:$0xff]
      %v165 = vld [vmem:[%s1 + $0x28] sm:$0xff]
      %v166 = vld [vmem:[%s1 + $0x30] sm:$0xff]
      %v167 = vld [vmem:[%s1 + $0x38] sm:$0xff]
      %v168 = vld [vmem:[%s1 + $0x40] sm:$0xff]
      %v169 = vld [vmem:[%s1 + $0x48] sm:$0xff]
      %v170 = vld [vmem:[%s1 + $0x50] sm:$0xff]
      %v171 = vld [vmem:[%s1 + $0x58] sm:$0xff]
      %v172 = vld [vmem:[%s1 + $0x60] sm:$0xff]
      %v173 = vld [vmem:[%s1 + $0x68] sm:$0xff]
      %v174 = vld [vmem:[%s1 + $0x70] sm:$0xff]
      %v175 = vld [vmem:[%s1 + $0x78] sm:$0xff]
      %v176 = vld [vmem:[%s1 + $0x80] sm:$0xff]
      %v177 = vld [vmem:[%s1 + $0x88] sm:$0xff]
      %v178 = vld [vmem:[%s1 + $0x90] sm:$0xff]
      %v179 = vld [vmem:[%s1 + $0x98] sm:$0xff]
      %v180 = vld [vmem:[%s1 + $0xa0] sm:$0xff]
      %v181 = vld [vmem:[%s1 + $0xa8] sm:$0xff]
      %v182 = vld [vmem:[%s1 + $0xb0] sm:$0xff]
      %v183 = vld [vmem:[%s1 + $0xb8] sm:$0xff]
      %v184 = vld [vmem:[%s1 + $0xc0] sm:$0xff]
      %v185 = vld [vmem:[%s1 + $0xc8] sm:$0xff]
      %v186 = vld [vmem:[%s1 + $0xd0] sm:$0xff]
      %v187 = vld [vmem:[%s1 + $0xd8] sm:$0xff]
      %v188 = vld [vmem:[%s1 + $0xe0] sm:$0xff]
      %v189 = vld [vmem:[%s1 + $0xe8] sm:$0xff]
      %v190 = vld [vmem:[%s1 + $0xf0] sm:$0xff]
      %v191 = vld [vmem:[%s1 + $0xf8] sm:$0xff]
      %v192 = vld [vmem:[%s1 + $0x100] sm:$0xff]
      %v193 = vld [vmem:[%s1 + $0x108] sm:$0xff]
      %v194 = vld [vmem:[%s1 + $0x110] sm:$0xff]
      %v195 = vld [vmem:[%s1 + $0x118] sm:$0xff]
      %v196 = vld [vmem:[%s1 + $0x120] sm:$0xff]
      %v197 = vld [vmem:[%s1 + $0x128] sm:$0xff]
      %v198 = vld [vmem:[%s1 + $0x130] sm:$0xff]
      %v199 = vld [vmem:[%s1 + $0x138] sm:$0xff]
      %v200 = vld [vmem:[%s1 + $0x140] sm:$0xff]
      %v201 = vld [vmem:[%s1 + $0x148] sm:$0xff]
      %v202 = vld [vmem:[%s1 + $0x150] sm:$0xff]
      %v203 = vld [vmem:[%s1 + $0x158] sm:$0xff]
      %v204 = vld [vmem:[%s1 + $0x160] sm:$0xff]
      %v205 = vld [vmem:[%s1 + $0x168] sm:$0xff]
      %v206 = vld [vmem:[%s1 + $0x170] sm:$0xff]
      %v207 = vld [vmem:[%s1 + $0x178] sm:$0xff]
      %v208 = vld [vmem:[%s1 + $0x180] sm:$0xff]
      %v209 = vld [vmem:[%s1 + $0x188] sm:$0xff]
      %v210 = vld [vmem:[%s1 + $0x190] sm:$0xff]
      %v211 = vld [vmem:[%s1 + $0x198] sm:$0xff]
      %v212 = vld [vmem:[%s1 + $0x1a0] sm:$0xff]
      %v213 = vld [vmem:[%s1 + $0x1a8] sm:$0xff]
      %v214 = vld [vmem:[%s1 + $0x1b0] sm:$0xff]
      %v215 = vld [vmem:[%s1 + $0x1b8] sm:$0xff]
      %v216 = vld [vmem:[%s1 + $0x1c0] sm:$0xff]
      %v217 = vld [vmem:[%s1 + $0x1c8] sm:$0xff]
      %v218 = vld [vmem:[%s1 + $0x1d0] sm:$0xff]
      %v219 = vld [vmem:[%s1 + $0x1d8] sm:$0xff]
      %v220 = vld [vmem:[%s1 + $0x1e0] sm:$0xff]
      %v221 = vld [vmem:[%s1 + $0x1e8] sm:$0xff]
      %v222 = vld [vmem:[%s1 + $0x1f0] sm:$0xff]
      %v223 = vld [vmem:[%s1 + $0x1f8] sm:$0xff]
      %v232 = vunpack.c.l.b16 %v152
      %v233 = vunpack.c.h.b16 %v152
      %v234 = vunpack.c.l.b16 %v153
      %v235 = vunpack.c.h.b16 %v153
      %v236 = vunpack.c.l.b16 %v154
      %v237 = vunpack.c.h.b16 %v154
      %v238 = vunpack.c.l.b16 %v155
      %v239 = vunpack.c.h.b16 %v155
      %v240 = vunpack.c.l.b16 %v156
      %v241 = vunpack.c.h.b16 %v156
      %v242 = vunpack.c.l.b16 %v157
      %v243 = vunpack.c.h.b16 %v157
      %v244 = vunpack.c.l.b16 %v158
      %v245 = vunpack.c.h.b16 %v158
      %v246 = vunpack.c.l.b16 %v159
      %v247 = vunpack.c.h.b16 %v159
      %v248 = vpack.c.b16 %v236, %v232
      %v249 = vpack.c.b16 %v237, %v233
      %v250 = vpack.c.b16 %v238, %v234
      %v251 = vpack.c.b16 %v239, %v235
      %v252 = vpack.c.b16 %v244, %v240
      %v253 = vpack.c.b16 %v245, %v241
      %v254 = vpack.c.b16 %v246, %v242
      %v255 = vpack.c.b16 %v247, %v243
      %v328 = vunpack.c.l.b16 %v160
      %v329 = vunpack.c.h.b16 %v160
      %v330 = vunpack.c.l.b16 %v161
      %v331 = vunpack.c.h.b16 %v161
      %v332 = vunpack.c.l.b16 %v162
      %v333 = vunpack.c.h.b16 %v162
      %v334 = vunpack.c.l.b16 %v163
      %v335 = vunpack.c.h.b16 %v163
      %v336 = vunpack.c.l.b16 %v164
      %v337 = vunpack.c.h.b16 %v164
      %v338 = vunpack.c.l.b16 %v165
      %v339 = vunpack.c.h.b16 %v165
      %v340 = vunpack.c.l.b16 %v166
      %v341 = vunpack.c.h.b16 %v166
      %v342 = vunpack.c.l.b16 %v167
      %v343 = vunpack.c.h.b16 %v167
      %v344 = vunpack.c.l.b16 %v168
      %v345 = vunpack.c.h.b16 %v168
      %v346 = vunpack.c.l.b16 %v169
      %v347 = vunpack.c.h.b16 %v169
      %v348 = vunpack.c.l.b16 %v170
      %v349 = vunpack.c.h.b16 %v170
      %v350 = vunpack.c.l.b16 %v171
      %v351 = vunpack.c.h.b16 %v171
      %v352 = vunpack.c.l.b16 %v172
      %v353 = vunpack.c.h.b16 %v172
      %v354 = vunpack.c.l.b16 %v173
      %v355 = vunpack.c.h.b16 %v173
      %v356 = vunpack.c.l.b16 %v174
      %v357 = vunpack.c.h.b16 %v174
      %v358 = vunpack.c.l.b16 %v175
      %v359 = vunpack.c.h.b16 %v175
      %v360 = vunpack.c.l.b16 %v176
      %v361 = vunpack.c.h.b16 %v176
      %v362 = vunpack.c.l.b16 %v177
      %v363 = vunpack.c.h.b16 %v177
      %v364 = vunpack.c.l.b16 %v178
      %v365 = vunpack.c.h.b16 %v178
      %v366 = vunpack.c.l.b16 %v179
      %v367 = vunpack.c.h.b16 %v179
      %v368 = vunpack.c.l.b16 %v180
      %v369 = vunpack.c.h.b16 %v180
      %v370 = vunpack.c.l.b16 %v181
      %v371 = vunpack.c.h.b16 %v181
      %v372 = vunpack.c.l.b16 %v182
      %v373 = vunpack.c.h.b16 %v182
      %v374 = vunpack.c.l.b16 %v183
      %v375 = vunpack.c.h.b16 %v183
      %v376 = vunpack.c.l.b16 %v184
      %v377 = vunpack.c.h.b16 %v184
      %v378 = vunpack.c.l.b16 %v185
      %v379 = vunpack.c.h.b16 %v185
      %v380 = vunpack.c.l.b16 %v186
      %v381 = vunpack.c.h.b16 %v186
      %v382 = vunpack.c.l.b16 %v187
      %v383 = vunpack.c.h.b16 %v187
      %v384 = vunpack.c.l.b16 %v188
      %v385 = vunpack.c.h.b16 %v188
      %v386 = vunpack.c.l.b16 %v189
      %v387 = vunpack.c.h.b16 %v189
      %v388 = vunpack.c.l.b16 %v190
      %v389 = vunpack.c.h.b16 %v190
      %v390 = vunpack.c.l.b16 %v191
      %v391 = vunpack.c.h.b16 %v191
      %v392 = vunpack.c.l.b16 %v192
      %v393 = vunpack.c.h.b16 %v192
      %v394 = vunpack.c.l.b16 %v193
      %v395 = vunpack.c.h.b16 %v193
      %v396 = vunpack.c.l.b16 %v194
      %v397 = vunpack.c.h.b16 %v194
      %v398 = vunpack.c.l.b16 %v195
      %v399 = vunpack.c.h.b16 %v195
      %v400 = vunpack.c.l.b16 %v196
      %v401 = vunpack.c.h.b16 %v196
      %v402 = vunpack.c.l.b16 %v197
      %v403 = vunpack.c.h.b16 %v197
      %v404 = vunpack.c.l.b16 %v198
      %v405 = vunpack.c.h.b16 %v198
      %v406 = vunpack.c.l.b16 %v199
      %v407 = vunpack.c.h.b16 %v199
      %v408 = vunpack.c.l.b16 %v200
      %v409 = vunpack.c.h.b16 %v200
      %v410 = vunpack.c.l.b16 %v201
      %v411 = vunpack.c.h.b16 %v201
      %v412 = vunpack.c.l.b16 %v202
      %v413 = vunpack.c.h.b16 %v202
      %v414 = vunpack.c.l.b16 %v203
      %v415 = vunpack.c.h.b16 %v203
      %v416 = vunpack.c.l.b16 %v204
      %v417 = vunpack.c.h.b16 %v204
      %v418 = vunpack.c.l.b16 %v205
      %v419 = vunpack.c.h.b16 %v205
      %v420 = vunpack.c.l.b16 %v206
      %v421 = vunpack.c.h.b16 %v206
      %v422 = vunpack.c.l.b16 %v207
      %v423 = vunpack.c.h.b16 %v207
      %v424 = vunpack.c.l.b16 %v208
      %v425 = vunpack.c.h.b16 %v208
      %v426 = vunpack.c.l.b16 %v209
      %v427 = vunpack.c.h.b16 %v209
      %v428 = vunpack.c.l.b16 %v210
      %v429 = vunpack.c.h.b16 %v210
      %v430 = vunpack.c.l.b16 %v211
      %v431 = vunpack.c.h.b16 %v211
      %v432 = vunpack.c.l.b16 %v212
      %v433 = vunpack.c.h.b16 %v212
      %v434 = vunpack.c.l.b16 %v213
      %v435 = vunpack.c.h.b16 %v213
      %v436 = vunpack.c.l.b16 %v214
      %v437 = vunpack.c.h.b16 %v214
      %v438 = vunpack.c.l.b16 %v215
      %v439 = vunpack.c.h.b16 %v215
      %v440 = vunpack.c.l.b16 %v216
      %v441 = vunpack.c.h.b16 %v216
      %v442 = vunpack.c.l.b16 %v217
      %v443 = vunpack.c.h.b16 %v217
      %v444 = vunpack.c.l.b16 %v218
      %v445 = vunpack.c.h.b16 %v218
      %v446 = vunpack.c.l.b16 %v219
      %v447 = vunpack.c.h.b16 %v219
      %v448 = vunpack.c.l.b16 %v220
      %v449 = vunpack.c.h.b16 %v220
      %v450 = vunpack.c.l.b16 %v221
      %v451 = vunpack.c.h.b16 %v221
      %v452 = vunpack.c.l.b16 %v222
      %v453 = vunpack.c.h.b16 %v222
      %v454 = vunpack.c.l.b16 %v223
      %v455 = vunpack.c.h.b16 %v223
      %v456 = vpack.c.b16 %v330, %v328
      %v457 = vpack.c.b16 %v331, %v329
      %v458 = vpack.c.b16 %v334, %v332
      %v459 = vpack.c.b16 %v335, %v333
      %v460 = vpack.c.b16 %v338, %v336
      %v461 = vpack.c.b16 %v339, %v337
      %v462 = vpack.c.b16 %v342, %v340
      %v463 = vpack.c.b16 %v343, %v341
      %v464 = vpack.c.b16 %v346, %v344
      %v465 = vpack.c.b16 %v347, %v345
      %v466 = vpack.c.b16 %v350, %v348
      %v467 = vpack.c.b16 %v351, %v349
      %v468 = vpack.c.b16 %v354, %v352
      %v469 = vpack.c.b16 %v355, %v353
      %v470 = vpack.c.b16 %v358, %v356
      %v471 = vpack.c.b16 %v359, %v357
      %v472 = vpack.c.b16 %v362, %v360
      %v473 = vpack.c.b16 %v363, %v361
      %v474 = vpack.c.b16 %v366, %v364
      %v475 = vpack.c.b16 %v367, %v365
      %v476 = vpack.c.b16 %v370, %v368
      %v477 = vpack.c.b16 %v371, %v369
      %v478 = vpack.c.b16 %v374, %v372
      %v479 = vpack.c.b16 %v375, %v373
      %v480 = vpack.c.b16 %v378, %v376
      %v481 = vpack.c.b16 %v379, %v377
      %v482 = vpack.c.b16 %v382, %v380
      %v483 = vpack.c.b16 %v383, %v381
      %v484 = vpack.c.b16 %v386, %v384
      %v485 = vpack.c.b16 %v387, %v385
      %v486 = vpack.c.b16 %v390, %v388
      %v487 = vpack.c.b16 %v391, %v389
      %v488 = vpack.c.b16 %v394, %v392
      %v489 = vpack.c.b16 %v395, %v393
      %v490 = vpack.c.b16 %v398, %v396
      %v491 = vpack.c.b16 %v399, %v397
      %v492 = vpack.c.b16 %v402, %v400
      %v493 = vpack.c.b16 %v403, %v401
      %v494 = vpack.c.b16 %v406, %v404
      %v495 = vpack.c.b16 %v407, %v405
      %v496 = vpack.c.b16 %v410, %v408
      %v497 = vpack.c.b16 %v411, %v409
      %v498 = vpack.c.b16 %v414, %v412
      %v499 = vpack.c.b16 %v415, %v413
      %v500 = vpack.c.b16 %v418, %v416
      %v501 = vpack.c.b16 %v419, %v417
      %v502 = vpack.c.b16 %v422, %v420
      %v503 = vpack.c.b16 %v423, %v421
      %v504 = vpack.c.b16 %v426, %v424
      %v505 = vpack.c.b16 %v427, %v425
      %v506 = vpack.c.b16 %v430, %v428
      %v507 = vpack.c.b16 %v431, %v429
      %v508 = vpack.c.b16 %v434, %v432
      %v509 = vpack.c.b16 %v435, %v433
      %v510 = vpack.c.b16 %v438, %v436
      %v511 = vpack.c.b16 %v439, %v437
      %v512 = vpack.c.b16 %v442, %v440
      %v513 = vpack.c.b16 %v443, %v441
      %v514 = vpack.c.b16 %v446, %v444
      %v515 = vpack.c.b16 %v447, %v445
      %v516 = vpack.c.b16 %v450, %v448
      %v517 = vpack.c.b16 %v451, %v449
      %v518 = vpack.c.b16 %v454, %v452
      %v519 = vpack.c.b16 %v455, %v453
      %584 = vmatprep.subr.bf16.mxu0 %v457
      %585 = vmatpush1.bf16.msra.mxu0 %v456
      %586 = vmatprep.subr.bf16.mxu0 %v459
      %587 = vmatpush1.bf16.msra.mxu0 %v458
      %588 = vmatprep.subr.bf16.mxu0 %v461
      %589 = vmatpush1.bf16.msra.mxu0 %v460
      %590 = vmatprep.subr.bf16.mxu0 %v463
      %591 = vmatpush1.bf16.msra.mxu0 %v462
      %592 = vmatprep.subr.bf16.mxu0 %v465
      %593 = vmatpush1.bf16.msra.mxu0 %v464
      %594 = vmatprep.subr.bf16.mxu0 %v467
      %595 = vmatpush1.bf16.msra.mxu0 %v466
      %596 = vmatprep.subr.bf16.mxu0 %v469
      %597 = vmatpush1.bf16.msra.mxu0 %v468
      %598 = vmatprep.subr.bf16.mxu0 %v471
      %599 = vmatpush1.bf16.msra.mxu0 %v470
      %600 = vmatprep.subr.bf16.mxu0 %v473
      %601 = vmatpush1.bf16.msra.mxu0 %v472
      %602 = vmatprep.subr.bf16.mxu0 %v475
      %603 = vmatpush1.bf16.msra.mxu0 %v474
      %604 = vmatprep.subr.bf16.mxu0 %v477
      %605 = vmatpush1.bf16.msra.mxu0 %v476
      %606 = vmatprep.subr.bf16.mxu0 %v479
      %607 = vmatpush1.bf16.msra.mxu0 %v478
      %608 = vmatprep.subr.bf16.mxu0 %v481
      %609 = vmatpush1.bf16.msra.mxu0 %v480
      %610 = vmatprep.subr.bf16.mxu0 %v483
      %611 = vmatpush1.bf16.msra.mxu0 %v482
      %612 = vmatprep.subr.bf16.mxu0 %v485
      %613 = vmatpush1.bf16.msra.mxu0 %v484
      %614 = vmatprep.subr.bf16.mxu0 %v487
      %615 = vmatpush1.bf16.msra.mxu0 %v486
      %616 = vmatprep.mubr.bf16.mxu0 %v249
      %617 = vmatmul.mubr.bf16.gmra.mrb[0].mxu0 %v248
      %v618 = vpop.f32.mrb[0].mxu0
      %v619 = vadd.f32 0.0, %v618
      %v620 = vpop.f32.mrb[0].mxu0
      %v621 = vadd.f32 0.0, %v620
      %v622 = vpop.f32.mrb[0].mxu0
      %v623 = vadd.f32 0.0, %v622
      %v624 = vpop.f32.mrb[0].mxu0
      %v625 = vadd.f32 0.0, %v624
      %626 = vmatprep.mubr.bf16.mxu0 %v253
      %627 = vmatmul.mubr.bf16.gmra.mrb[0].mxu0 %v252
      %v628 = vpop.f32.mrb[0].mxu0
      %v629 = vadd.f32 0.0, %v628
      %v630 = vpop.f32.mrb[0].mxu0
      %v631 = vadd.f32 0.0, %v630
      %v632 = vpop.f32.mrb[0].mxu0
      %v633 = vadd.f32 0.0, %v632
      %v634 = vpop.f32.mrb[0].mxu0
      %v635 = vadd.f32 0.0, %v634
      %636 = vdwg.mxu0
      %637 = vmatprep.subr.bf16.mxu0 %v489
      %638 = vmatpush1.bf16.msra.mxu0 %v488
      %639 = vmatprep.subr.bf16.mxu0 %v491
      %640 = vmatpush1.bf16.msra.mxu0 %v490
      %641 = vmatprep.subr.bf16.mxu0 %v493
      %642 = vmatpush1.bf16.msra.mxu0 %v492
      %643 = vmatprep.subr.bf16.mxu0 %v495
      %644 = vmatpush1.bf16.msra.mxu0 %v494
      %645 = vmatprep.subr.bf16.mxu0 %v497
      %646 = vmatpush1.bf16.msra.mxu0 %v496
      %647 = vmatprep.subr.bf16.mxu0 %v499
      %648 = vmatpush1.bf16.msra.mxu0 %v498
      %649 = vmatprep.subr.bf16.mxu0 %v501
      %650 = vmatpush1.bf16.msra.mxu0 %v500
      %651 = vmatprep.subr.bf16.mxu0 %v503
      %652 = vmatpush1.bf16.msra.mxu0 %v502
      %653 = vmatprep.subr.bf16.mxu0 %v505
      %654 = vmatpush1.bf16.msra.mxu0 %v504
      %655 = vmatprep.subr.bf16.mxu0 %v507
      %656 = vmatpush1.bf16.msra.mxu0 %v506
      %657 = vmatprep.subr.bf16.mxu0 %v509
      %658 = vmatpush1.bf16.msra.mxu0 %v508
      %659 = vmatprep.subr.bf16.mxu0 %v511
      %660 = vmatpush1.bf16.msra.mxu0 %v510
      %661 = vmatprep.subr.bf16.mxu0 %v513
      %662 = vmatpush1.bf16.msra.mxu0 %v512
      %663 = vmatprep.subr.bf16.mxu0 %v515
      %664 = vmatpush1.bf16.msra.mxu0 %v514
      %665 = vmatprep.subr.bf16.mxu0 %v517
      %666 = vmatpush1.bf16.msra.mxu0 %v516
      %667 = vmatprep.subr.bf16.mxu0 %v519
      %668 = vmatpush1.bf16.msra.mxu0 %v518
      %669 = vmatprep.mubr.bf16.mxu0 %v251
      %670 = vmatmul.mubr.bf16.gmra.mrb[0].mxu0 %v250
      %v671 = vpop.f32.mrb[0].mxu0
      %v672 = vadd.f32 %v619, %v671
      %v673 = vpop.f32.mrb[0].mxu0
      %v674 = vadd.f32 %v621, %v673
      %v675 = vpop.f32.mrb[0].mxu0
      %v676 = vadd.f32 %v623, %v675
      %v677 = vpop.f32.mrb[0].mxu0
      %v678 = vadd.f32 %v625, %v677
      %679 = vmatprep.mubr.bf16.mxu0 %v255
      %680 = vmatmul.mubr.bf16.gmra.mrb[0].mxu0 %v254
      %v681 = vpop.f32.mrb[0].mxu0
      %v682 = vadd.f32 %v629, %v681
      %v683 = vpop.f32.mrb[0].mxu0
      %v684 = vadd.f32 %v631, %v683
      %v685 = vpop.f32.mrb[0].mxu0
      %v686 = vadd.f32 %v633, %v685
      %v687 = vpop.f32.mrb[0].mxu0
      %v688 = vadd.f32 %v635, %v687
      %689 = vdwg.mxu0
      %690 = vst [vmem:[%s150] sm:$0xff] %v672
      %691 = vst [vmem:[%s150 + $0x8] sm:$0xff] %v674
      %692 = vst [vmem:[%s150 + $0x10] sm:$0xff] %v676
      %693 = vst [vmem:[%s150 + $0x18] sm:$0xff] %v678
      %694 = vst [vmem:[%s150 + $0x20] sm:$0xff] %v682
      %695 = vst [vmem:[%s150 + $0x28] sm:$0xff] %v684
      %696 = vst [vmem:[%s150 + $0x30] sm:$0xff] %v686
      %697 = vst [vmem:[%s150 + $0x38] sm:$0xff] %v688
      %s698 = smul.u32 4, %s13
      %p699 = scmp.lt.s32.totalorder %s698, 7
      %s700 = scalar_select %p699, %s698, 7
      %s701 = smul.addr %s700, 2
      %s702 = smul.addr %s701, 8
      %s703 = scalar_lea.vmem %s2, %s702
      // Predicated region
      $region29: #{dc_generator_forward.4} parent=27 // pred_check
        %p704 = pneg %p78
      $region30: #{dc_generator_forward.4} parent=27 // pred_check_branch
        %706 = sbr.rel (%p704) target = $region32
      $region31: #{dc_generator_forward.4} parent=27 // pred_region
        %s707 = smul.u32 4, %s13
      $region32: #{dc_generator_forward.4} parent=27 // pred_fallthru
        _
    $region28: #{dc_generator_forward.4} parent=5 // pred_fallthru
      _
    %p708 = scmp.le.s32.totalorder 2, %s8
    // Predicated region
    $region33: #{dc_generator_forward.4} parent=5 // pred_check
      %p709 = pneg %p708
    $region34: #{dc_generator_forward.4} parent=5 // pred_check_branch
      %711 = sbr.rel (%p709) target = $region36
    $region35: #{dc_generator_forward.4} parent=5 // pred_region
      %s712 = ssub.s32 %s8, 2
      // Predicated region
      $region37: #{dc_generator_forward.4} parent=35 // pred_check
        %p713 = pneg %p84
      $region38: #{dc_generator_forward.4} parent=35 // pred_check_branch
        %715 = sbr.rel (%p713) target = $region40
      $region39: #{dc_generator_forward.4} parent=35 // pred_region
        %s716 = smul.u32 4, %s14
        %p717 = scmp.lt.s32.totalorder %s716, 7
        %s718 = scalar_select %p717, %s716, 7
        %s719 = smul.addr %s718, 2
        %s720 = smul.addr %s719, 8
        %s721 = scalar_lea.vmem %s2, %s720
      $region40: #{dc_generator_forward.4} parent=35 // pred_fallthru
        _
    $region36: #{dc_generator_forward.4} parent=5 // pred_fallthru
      _
  $region6: #{dc_generator_forward.4} parent=0 // loop_footer
    %s12 = sadd.s32 1, %s8
  $region7: #{dc_generator_forward.4} parent=0 // loop_footer_branch
    %7 = sbr.rel target = $region3
  $region8: #{dc_generator_forward.4} parent=0 // loop_exit
    _

// kernel: dc_generator_forward.5
$region0: #{dc_generator_forward.5}
  #allocation0 [shape = 'u32[]', space=smem, size = 0x4, offset = 0x4, fixed_abs, tag = 'smem constant byte address 0x4 - core index']
  #allocation1 [shape = 'u32[144,128]{1,0:T(1,128)}', space=vmem, size = 0x12000, scoped, tag = 'internal scratch']
  %s0 = inlined_call_operand.vmem [shape: bf16[192,256], index: 0, kind: input, shape index: {}]
  %s1 = inlined_call_operand.vmem [shape: bf16[256,128], index: 1, kind: input, shape index: {}]
  %s2 = inlined_call_operand.vmem [shape: f32[192,128], index: 2, kind: output, shape index: {}]
  %s3 = sld [smem:[#allocation0]]
  $region41: #{dc_generator_forward.5} parent=0
    _
  %s5 = ssub.s32 1, %s3
  %s6 = scalar_select 0, %s5, %s3
  loop: start=0, step=1, limit=4
  $region2: #{dc_generator_forward.5} parent=0 // loop_pre_header
    _
  $region3: #{dc_generator_forward.5} parent=0 // loop_header
    %s8 = sphi 0, %s12
    %p9 = scmp.ge.s32.totalorder %s8, 4
    %s18 = sphi 0, %s20
    %s21 = sphi 0, %s18
    %s22 = sphi 0, %s21
    %s38 = sphi 0, %s22
    %s42 = sphi 0, %s42
    %s44 = sphi 0, %s42
    %s45 = sphi 0, %s44
    %s59 = sphi 0, %s45
    %s65 = sphi 0, %s67
    %s68 = sphi 0, %s65
    %s69 = sphi 0, %s68
    %s85 = sphi 0, %s69
  $region4: #{dc_generator_forward.5} parent=0 // loop_header_branch
    %11 = sbr.rel (%p9) target = $region8
  $region5: #{dc_generator_forward.5} parent=0 // loop_body
    %s13 = ssub.s32 %s8, 1
    %s14 = ssub.s32 %s8, 2
    %s15 = sadd.s32 %s8, 1
    %s16 = ssub.s32 %s8, %s15
    %p17 = scmp.eq.s32.totalorder %s16, 0
    %s19 = sadd.s32 %s18, 1
    %s20 = scalar_select %p17, %s18, %s19
    %p23 = pneg %p17
    %p24 = scmp.eq.s32.totalorder %s8, 1
    %p25 = por %p23, %p24
    %p26 = scmp.ne.s32.totalorder %s18, %s21
    %p27 = scmp.eq.s32.totalorder %s8, 0
    %p28 = por %p26, %p27
    %p29 = scmp.ne.s32.totalorder %s18, %s21
    %p30 = scmp.eq.s32.totalorder %s13, 1
    %p31 = por %p29, %p30
    %p32 = scmp.ne.s32.totalorder %s21, %s22
    %p33 = scmp.eq.s32.totalorder %s13, 0
    %p34 = por %p32, %p33
    %p35 = scmp.ne.s32.totalorder %s21, %s22
    %p36 = scmp.eq.s32.totalorder %s14, 1
    %p37 = por %p35, %p36
    %p39 = scmp.ne.s32.totalorder %s22, %s38
    %p40 = scmp.eq.s32.totalorder %s14, 0
    %p41 = por %p39, %p40
    %s43 = sadd.s32 %s42, 1
    %p46 = scmp.eq.s32.totalorder %s8, 1
    %p47 = scmp.ne.s32.totalorder %s42, %s44
    %p48 = scmp.eq.s32.totalorder %s8, 0
    %p49 = por %p47, %p48
    %p50 = scmp.ne.s32.totalorder %s42, %s44
    %p51 = scmp.eq.s32.totalorder %s13, 1
    %p52 = por %p50, %p51
    %p53 = scmp.ne.s32.totalorder %s44, %s45
    %p54 = scmp.eq.s32.totalorder %s13, 0
    %p55 = por %p53, %p54
    %p56 = scmp.ne.s32.totalorder %s44, %s45
    %p57 = scmp.eq.s32.totalorder %s14, 1
    %p58 = por %p56, %p57
    %p60 = scmp.ne.s32.totalorder %s45, %s59
    %p61 = scmp.eq.s32.totalorder %s14, 0
    %p62 = por %p60, %p61
    %s63 = ssub.s32 %s8, %s15
    %p64 = scmp.eq.s32.totalorder %s63, 0
    %s66 = sadd.s32 %s65, 1
    %s67 = scalar_select %p64, %s65, %s66
    %p70 = pneg %p64
    %p71 = scmp.eq.s32.totalorder %s8, 1
    %p72 = por %p70, %p71
    %p73 = scmp.ne.s32.totalorder %s65, %s68
    %p74 = scmp.eq.s32.totalorder %s8, 0
    %p75 = por %p73, %p74
    %p76 = scmp.ne.s32.totalorder %s65, %s68
    %p77 = scmp.eq.s32.totalorder %s13, 1
    %p78 = por %p76, %p77
    %p79 = scmp.ne.s32.totalorder %s68, %s69
    %p80 = scmp.eq.s32.totalorder %s13, 0
    %p81 = por %p79, %p80
    %p82 = scmp.ne.s32.totalorder %s68, %s69
    %p83 = scmp.eq.s32.totalorder %s14, 1
    %p84 = por %p82, %p83
    %p86 = scmp.ne.s32.totalorder %s69, %s85
    %p87 = scmp.eq.s32.totalorder %s14, 0
    %p88 = por %p86, %p87
    %p89 = scmp.le.s32.totalorder 1, %s8
    %p90 = scmp.lt.s32.totalorder %s8, 3
    %p91 = pnand %p89, %p90
    %p92 = pneg %p91
    // Predicated region
    $region9: #{dc_generator_forward.5} parent=5 // pred_check
      _
    $region10: #{dc_generator_forward.5} parent=5 // pred_check_branch
      %94 = sbr.rel (%p91) target = $region12
    $region11: #{dc_generator_forward.5} parent=5 // pred_region
      %s95 = ssub.s32 %s8, 1
      // Predicated region
      $region13: #{dc_generator_forward.5} parent=11 // pred_check
        %p96 = pneg %p55
      $region14: #{dc_generator_forward.5} parent=11 // pred_check_branch
        %98 = sbr.rel (%p96) target = $region16
      $region15: #{dc_generator_forward.5} parent=11 // pred_region
        _
      $region16: #{dc_generator_forward.5} parent=11 // pred_fallthru
        _
    $region12: #{dc_generator_forward.5} parent=5 // pred_fallthru
      _
    %p99 = scmp.lt.s32.totalorder %s8, 2
    // Predicated region
    $region17: #{dc_generator_forward.5} parent=5 // pred_check
      %p100 = pneg %p99
    $region18: #{dc_generator_forward.5} parent=5 // pred_check_branch
      %102 = sbr.rel (%p100) target = $region20
    $region19: #{dc_generator_forward.5} parent=5 // pred_region
      // Predicated region
      $region21: #{dc_generator_forward.5} parent=19 // pred_check
        %p103 = pneg %p28
      $region22: #{dc_generator_forward.5} parent=19 // pred_check_branch
        %105 = sbr.rel (%p103) target = $region24
      $region23: #{dc_generator_forward.5} parent=19 // pred_region
        %s106 = smul.u32 12, %s8
        %p107 = scmp.lt.s32.totalorder %s106, 23
        %s108 = scalar_select %p107, %s106, 23
        %s109 = smul.addr %s108, 2
        %s110 = smul.addr %s109, 4
        %s111 = scalar_lea.vmem %s0, %s110
        %s112 = smul.u32 12, %s8
      $region24: #{dc_generator_forward.5} parent=19 // pred_fallthru
        _
    $region20: #{dc_generator_forward.5} parent=5 // pred_fallthru
      _
    %p113 = scmp.le.s32.totalorder 1, %s8
    %p114 = scmp.lt.s32.totalorder %s8, 3
    %p115 = pnand %p113, %p114
    %p116 = pneg %p115
    // Predicated region
    $region25: #{dc_generator_forward.5} parent=5 // pred_check
      _
    $region26: #{dc_generator_forward.5} parent=5 // pred_check_branch
      %118 = sbr.rel (%p115) target = $region28
    $region27: #{dc_generator_forward.5} parent=5 // pred_region
      %s119 = ssub.s32 %s8, 1
      %s120 = smul.u32 12, %s13
      %p121 = scmp.lt.s32.totalorder %s120, 23
      %s122 = scalar_select %p121, %s120, 23
      %s123 = smul.addr %s122, 2
      %s124 = smul.addr %s123, 4
      %s125 = scalar_lea.vmem %s0, %s124
      %p126 = pneg %p34
      %p127 = pneg %p31
      %p128 = pneg %p55
      %p129 = pneg %p52
      %p130 = pneg %p81
      %p131 = pneg %p78
      %s132 = smul.u32 12, %s13
      %p133 = scmp.lt.s32.totalorder %s132, 23
      %s134 = scalar_select %p133, %s132, 23
      %s135 = smul.addr %s134, 8
      %s136 = scalar_lea.vmem %s2, %s135
      %s137 = smul.u32 12, %s13
      %p138 = scmp.lt.s32.totalorder %s137, 23
      %s139 = scalar_select %p138, %s137, 23
      %s140 = smul.addr %s139, 2
      %s141 = smul.addr %s140, 4
      %s142 = scalar_lea.vmem %s0, %s141
      %s143 = smul.u32 12, %s13
      %s144 = smul.u32 12, %s13
      %p145 = scmp.lt.s32.totalorder %s144, 23
      %s146 = scalar_select %p145, %s144, 23
      %s147 = smul.addr %s146, 8
      %s148 = scalar_lea.vmem %s2, %s147
      %s149 = smul.u32 12, %s13
      %v151 = vld [vmem:[%s142] sm:$0xff]
      %v152 = vld [vmem:[%s142 + $0x8] sm:$0xff]
      %v153 = vld [vmem:[%s142 + $0x10] sm:$0xff]
      %v154 = vld [vmem:[%s142 + $0x18] sm:$0xff]
      %v155 = vld [vmem:[%s142 + $0x20] sm:$0xff]
      %v156 = vld [vmem:[%s142 + $0x28] sm:$0xff]
      %v157 = vld [vmem:[%s142 + $0x30] sm:$0xff]
      %v158 = vld [vmem:[%s142 + $0x38] sm:$0xff]
      %v159 = vld [vmem:[%s142 + $0x40] sm:$0xff]
      %v160 = vld [vmem:[%s142 + $0x48] sm:$0xff]
      %v161 = vld [vmem:[%s142 + $0x50] sm:$0xff]
      %v162 = vld [vmem:[%s142 + $0x58] sm:$0xff]
      %v163 = vld [vmem:[%s1] sm:$0xf]
      %v164 = vld [vmem:[%s1 + $0x4] sm:$0xf]
      %v165 = vld [vmem:[%s1 + $0x8] sm:$0xf]
      %v166 = vld [vmem:[%s1 + $0xc] sm:$0xf]
      %v167 = vld [vmem:[%s1 + $0x10] sm:$0xf]
      %v168 = vld [vmem:[%s1 + $0x14] sm:$0xf]
      %v169 = vld [vmem:[%s1 + $0x18] sm:$0xf]
      %v170 = vld [vmem:[%s1 + $0x1c] sm:$0xf]
      %v171 = vld [vmem:[%s1 + $0x20] sm:$0xf]
      %v172 = vld [vmem:[%s1 + $0x24] sm:$0xf]
      %v173 = vld [vmem:[%s1 + $0x28] sm:$0xf]
      %v174 = vld [vmem:[%s1 + $0x2c] sm:$0xf]
      %v175 = vld [vmem:[%s1 + $0x30] sm:$0xf]
      %v176 = vld [vmem:[%s1 + $0x34] sm:$0xf]
      %v177 = vld [vmem:[%s1 + $0x38] sm:$0xf]
      %v178 = vld [vmem:[%s1 + $0x3c] sm:$0xf]
      %v179 = vld [vmem:[%s1 + $0x40] sm:$0xf]
      %v180 = vld [vmem:[%s1 + $0x44] sm:$0xf]
      %v181 = vld [vmem:[%s1 + $0x48] sm:$0xf]
      %v182 = vld [vmem:[%s1 + $0x4c] sm:$0xf]
      %v183 = vld [vmem:[%s1 + $0x50] sm:$0xf]
      %v184 = vld [vmem:[%s1 + $0x54] sm:$0xf]
      %v185 = vld [vmem:[%s1 + $0x58] sm:$0xf]
      %v186 = vld [vmem:[%s1 + $0x5c] sm:$0xf]
      %v187 = vld [vmem:[%s1 + $0x60] sm:$0xf]
      %v188 = vld [vmem:[%s1 + $0x64] sm:$0xf]
      %v189 = vld [vmem:[%s1 + $0x68] sm:$0xf]
      %v190 = vld [vmem:[%s1 + $0x6c] sm:$0xf]
      %v191 = vld [vmem:[%s1 + $0x70] sm:$0xf]
      %v192 = vld [vmem:[%s1 + $0x74] sm:$0xf]
      %v193 = vld [vmem:[%s1 + $0x78] sm:$0xf]
      %v194 = vld [vmem:[%s1 + $0x7c] sm:$0xf]
      %v207 = vunpack.c.l.b16 %v151
      %v208 = vunpack.c.h.b16 %v151
      %v209 = vunpack.c.l.b16 %v152
      %v210 = vunpack.c.h.b16 %v152
      %v211 = vunpack.c.l.b16 %v153
      %v212 = vunpack.c.h.b16 %v153
      %v213 = vunpack.c.l.b16 %v154
      %v214 = vunpack.c.h.b16 %v154
      %v215 = vunpack.c.l.b16 %v155
      %v216 = vunpack.c.h.b16 %v155
      %v217 = vunpack.c.l.b16 %v156
      %v218 = vunpack.c.h.b16 %v156
      %v219 = vunpack.c.l.b16 %v157
      %v220 = vunpack.c.h.b16 %v157
      %v221 = vunpack.c.l.b16 %v158
      %v222 = vunpack.c.h.b16 %v158
      %v223 = vunpack.c.l.b16 %v159
      %v224 = vunpack.c.h.b16 %v159
      %v225 = vunpack.c.l.b16 %v160
      %v226 = vunpack.c.h.b16 %v160
      %v227 = vunpack.c.l.b16 %v161
      %v228 = vunpack.c.h.b16 %v161
      %v229 = vunpack.c.l.b16 %v162
      %v230 = vunpack.c.h.b16 %v162
      %v231 = vpack.c.b16 %v209, %v207
      %v232 = vpack.c.b16 %v210, %v208
      %v233 = vpack.c.b16 %v213, %v211
      %v234 = vpack.c.b16 %v214, %v212
      %v235 = vpack.c.b16 %v217, %v215
      %v236 = vpack.c.b16 %v218, %v216
      %v237 = vpack.c.b16 %v221, %v219
      %v238 = vpack.c.b16 %v222, %v220
      %v239 = vpack.c.b16 %v225, %v223
      %v240 = vpack.c.b16 %v226, %v224
      %v241 = vpack.c.b16 %v229, %v227
      %v242 = vpack.c.b16 %v230, %v228
      %v287 = vunpack.c.l.b16 %v163
      %v288 = vunpack.c.l.b16 %v164
      %v289 = vunpack.c.l.b16 %v165
      %v290 = vunpack.c.l.b16 %v166
      %v291 = vunpack.c.l.b16 %v167
      %v292 = vunpack.c.l.b16 %v168
      %v293 = vunpack.c.l.b16 %v169
      %v294 = vunpack.c.l.b16 %v170
      %v295 = vunpack.c.l.b16 %v171
      %v296 = vunpack.c.l.b16 %v172
      %v297 = vunpack.c.l.b16 %v173
      %v298 = vunpack.c.l.b16 %v174
      %v299 = vunpack.c.l.b16 %v175
      %v300 = vunpack.c.l.b16 %v176
      %v301 = vunpack.c.l.b16 %v177
      %v302 = vunpack.c.l.b16 %v178
      %v303 = vunpack.c.l.b16 %v179
      %v304 = vunpack.c.l.b16 %v180
      %v305 = vunpack.c.l.b16 %v181
      %v306 = vunpack.c.l.b16 %v182
      %v307 = vunpack.c.l.b16 %v183
      %v308 = vunpack.c.l.b16 %v184
      %v309 = vunpack.c.l.b16 %v185
      %v310 = vunpack.c.l.b16 %v186
      %v311 = vunpack.c.l.b16 %v187
      %v312 = vunpack.c.l.b16 %v188
      %v313 = vunpack.c.l.b16 %v189
      %v314 = vunpack.c.l.b16 %v190
      %v315 = vunpack.c.l.b16 %v191
      %v316 = vunpack.c.l.b16 %v192
      %v317 = vunpack.c.l.b16 %v193
      %v318 = vunpack.c.l.b16 %v194
      %v319 = vpack.c.b16 %v288, %v287
      %v320 = vpack.c.b16 %v290, %v289
      %v321 = vpack.c.b16 %v292, %v291
      %v322 = vpack.c.b16 %v294, %v293
      %v323 = vpack.c.b16 %v296, %v295
      %v324 = vpack.c.b16 %v298, %v297
      %v325 = vpack.c.b16 %v300, %v299
      %v326 = vpack.c.b16 %v302, %v301
      %v327 = vpack.c.b16 %v304, %v303
      %v328 = vpack.c.b16 %v306, %v305
      %v329 = vpack.c.b16 %v308, %v307
      %v330 = vpack.c.b16 %v310, %v309
      %v331 = vpack.c.b16 %v312, %v311
      %v332 = vpack.c.b16 %v314, %v313
      %v333 = vpack.c.b16 %v316, %v315
      %v334 = vpack.c.b16 %v318, %v317
      %351 = vmatprep.subr.bf16.mxu0 0
      %352 = vmatpush1.bf16.msra.mxu0 %v319
      %353 = vmatprep.subr.bf16.mxu0 0
      %354 = vmatpush1.bf16.msra.mxu0 %v320
      %355 = vmatprep.subr.bf16.mxu0 0
      %356 = vmatpush1.bf16.msra.mxu0 %v321
      %357 = vmatprep.subr.bf16.mxu0 0
      %358 = vmatpush1.bf16.msra.mxu0 %v322
      %359 = vmatprep.subr.bf16.mxu0 0
      %360 = vmatpush1.bf16.msra.mxu0 %v323
      %361 = vmatprep.subr.bf16.mxu0 0
      %362 = vmatpush1.bf16.msra.mxu0 %v324
      %363 = vmatprep.subr.bf16.mxu0 0
      %364 = vmatpush1.bf16.msra.mxu0 %v325
      %365 = vmatprep.subr.bf16.mxu0 0
      %366 = vmatpush1.bf16.msra.mxu0 %v326
      %367 = vmatprep.subr.bf16.mxu0 0
      %368 = vmatpush1.bf16.msra.mxu0 %v327
      %369 = vmatprep.subr.bf16.mxu0 0
      %370 = vmatpush1.bf16.msra.mxu0 %v328
      %371 = vmatprep.subr.bf16.mxu0 0
      %372 = vmatpush1.bf16.msra.mxu0 %v329
      %373 = vmatprep.subr.bf16.mxu0 0
      %374 = vmatpush1.bf16.msra.mxu0 %v330
      %375 = vmatprep.subr.bf16.mxu0 0
      %376 = vmatpush1.bf16.msra.mxu0 %v331
      %377 = vmatprep.subr.bf16.mxu0 0
      %378 = vmatpush1.bf16.msra.mxu0 %v332
      %379 = vmatprep.subr.bf16.mxu0 0
      %380 = vmatpush1.bf16.msra.mxu0 %v333
      %381 = vmatprep.subr.bf16.mxu0 0
      %382 = vmatpush1.bf16.msra.mxu0 %v334
      %383 = vmatprep.mubr.bf16.mxu0 %v232
      %384 = vmatmul.mubr.bf16.gmra.mrb[0].mxu0 %v231
      %v385 = vpop.f32.mrb[0].mxu0
      %v386 = vadd.f32 0.0, %v385
      %v387 = vpop.f32.mrb[0].mxu0
      %v388 = vpop.f32.mrb[0].mxu0
      %v389 = vadd.f32 0.0, %v388
      %v390 = vpop.f32.mrb[0].mxu0
      %391 = vmatprep.mubr.bf16.mxu0 %v234
      %392 = vmatmul.mubr.bf16.gmra.mrb[0].mxu0 %v233
      %v393 = vpop.f32.mrb[0].mxu0
      %v394 = vadd.f32 0.0, %v393
      %v395 = vpop.f32.mrb[0].mxu0
      %v396 = vpop.f32.mrb[0].mxu0
      %v397 = vadd.f32 0.0, %v396
      %v398 = vpop.f32.mrb[0].mxu0
      %399 = vmatprep.mubr.bf16.mxu0 %v236
      %400 = vmatmul.mubr.bf16.gmra.mrb[0].mxu0 %v235
      %v401 = vpop.f32.mrb[0].mxu0
      %v402 = vadd.f32 0.0, %v401
      %v403 = vpop.f32.mrb[0].mxu0
      %v404 = vpop.f32.mrb[0].mxu0
      %v405 = vadd.f32 0.0, %v404
      %v406 = vpop.f32.mrb[0].mxu0
      %407 = vmatprep.mubr.bf16.mxu0 %v238
      %408 = vmatmul.mubr.bf16.gmra.mrb[0].mxu0 %v237
      %v409 = vpop.f32.mrb[0].mxu0
      %v410 = vadd.f32 0.0, %v409
      %v411 = vpop.f32.mrb[0].mxu0
      %v412 = vpop.f32.mrb[0].mxu0
      %v413 = vadd.f32 0.0, %v412
      %v414 = vpop.f32.mrb[0].mxu0
      %415 = vmatprep.mubr.bf16.mxu0 %v240
      %416 = vmatmul.mubr.bf16.gmra.mrb[0].mxu0 %v239
      %v417 = vpop.f32.mrb[0].mxu0
      %v418 = vadd.f32 0.0, %v417
      %v419 = vpop.f32.mrb[0].mxu0
      %v420 = vpop.f32.mrb[0].mxu0
      %v421 = vadd.f32 0.0, %v420
      %v422 = vpop.f32.mrb[0].mxu0
      %423 = vmatprep.mubr.bf16.mxu0 %v242
      %424 = vmatmul.mubr.bf16.gmra.mrb[0].mxu0 %v241
      %v425 = vpop.f32.mrb[0].mxu0
      %v426 = vadd.f32 0.0, %v425
      %v427 = vpop.f32.mrb[0].mxu0
      %v428 = vpop.f32.mrb[0].mxu0
      %v429 = vadd.f32 0.0, %v428
      %v430 = vpop.f32.mrb[0].mxu0
      %431 = vdwg.mxu0
      %432 = vst [vmem:[%s148] sm:$0xff] %v386
      %433 = vst [vmem:[%s148 + $0x8] sm:$0xff] %v389
      %434 = vst [vmem:[%s148 + $0x10] sm:$0xff] %v394
      %435 = vst [vmem:[%s148 + $0x18] sm:$0xff] %v397
      %436 = vst [vmem:[%s148 + $0x20] sm:$0xff] %v402
      %437 = vst [vmem:[%s148 + $0x28] sm:$0xff] %v405
      %438 = vst [vmem:[%s148 + $0x30] sm:$0xff] %v410
      %439 = vst [vmem:[%s148 + $0x38] sm:$0xff] %v413
      %440 = vst [vmem:[%s148 + $0x40] sm:$0xff] %v418
      %441 = vst [vmem:[%s148 + $0x48] sm:$0xff] %v421
      %442 = vst [vmem:[%s148 + $0x50] sm:$0xff] %v426
      %443 = vst [vmem:[%s148 + $0x58] sm:$0xff] %v429
      %s444 = smul.u32 12, %s13
      %p445 = scmp.lt.s32.totalorder %s444, 23
      %s446 = scalar_select %p445, %s444, 23
      %s447 = smul.addr %s446, 8
      %s448 = scalar_lea.vmem %s2, %s447
      // Predicated region
      $region29: #{dc_generator_forward.5} parent=27 // pred_check
        %p449 = pneg %p78
      $region30: #{dc_generator_forward.5} parent=27 // pred_check_branch
        %451 = sbr.rel (%p449) target = $region32
      $region31: #{dc_generator_forward.5} parent=27 // pred_region
        %s452 = smul.u32 12, %s13
      $region32: #{dc_generator_forward.5} parent=27 // pred_fallthru
        _
    $region28: #{dc_generator_forward.5} parent=5 // pred_fallthru
      _
    %p453 = scmp.le.s32.totalorder 2, %s8
    // Predicated region
    $region33: #{dc_generator_forward.5} parent=5 // pred_check
      %p454 = pneg %p453
    $region34: #{dc_generator_forward.5} parent=5 // pred_check_branch
      %456 = sbr.rel (%p454) target = $region36
    $region35: #{dc_generator_forward.5} parent=5 // pred_region
      %s457 = ssub.s32 %s8, 2
      // Predicated region
      $region37: #{dc_generator_forward.5} parent=35 // pred_check
        %p458 = pneg %p84
      $region38: #{dc_generator_forward.5} parent=35 // pred_check_branch
        %460 = sbr.rel (%p458) target = $region40
      $region39: #{dc_generator_forward.5} parent=35 // pred_region
        %s461 = smul.u32 12, %s14
        %p462 = scmp.lt.s32.totalorder %s461, 23
        %s463 = scalar_select %p462, %s461, 23
        %s464 = smul.addr %s463, 8
        %s465 = scalar_lea.vmem %s2, %s464
      $region40: #{dc_generator_forward.5} parent=35 // pred_fallthru
        _
    $region36: #{dc_generator_forward.5} parent=5 // pred_fallthru
      _
  $region6: #{dc_generator_forward.5} parent=0 // loop_footer
    %s12 = sadd.s32 1, %s8
  $region7: #{dc_generator_forward.5} parent=0 // loop_footer_branch
    %7 = sbr.rel target = $region3
  $region8: #{dc_generator_forward.5} parent=0 // loop_exit
    _

// kernel: dc_generator_forward.6
$region0: #{dc_generator_forward.6}
  #allocation0 [shape = 'u32[]', space=smem, size = 0x4, offset = 0x4, fixed_abs, tag = 'smem constant byte address 0x4 - core index']
  #allocation1 [shape = 'u32[144,128]{1,0:T(1,128)}', space=vmem, size = 0x12000, scoped, tag = 'internal scratch']
  %s0 = inlined_call_operand.vmem [shape: bf16[608,128], index: 0, kind: input, shape index: {}]
  %s1 = inlined_call_operand.vmem [shape: bf16[128,128], index: 1, kind: input, shape index: {}]
  %s2 = inlined_call_operand.vmem [shape: f32[608,128], index: 2, kind: output, shape index: {}]
  %s3 = sld [smem:[#allocation0]]
  $region41: #{dc_generator_forward.6} parent=0
    _
  %s5 = ssub.s32 1, %s3
  %s6 = scalar_select 0, %s5, %s3
  loop: start=0, step=1, limit=4
  $region2: #{dc_generator_forward.6} parent=0 // loop_pre_header
    _
  $region3: #{dc_generator_forward.6} parent=0 // loop_header
    %s8 = sphi 0, %s12
    %p9 = scmp.ge.s32.totalorder %s8, 4
    %s18 = sphi 0, %s20
    %s21 = sphi 0, %s18
    %s22 = sphi 0, %s21
    %s38 = sphi 0, %s22
    %s42 = sphi 0, %s42
    %s44 = sphi 0, %s42
    %s45 = sphi 0, %s44
    %s59 = sphi 0, %s45
    %s65 = sphi 0, %s67
    %s68 = sphi 0, %s65
    %s69 = sphi 0, %s68
    %s85 = sphi 0, %s69
  $region4: #{dc_generator_forward.6} parent=0 // loop_header_branch
    %11 = sbr.rel (%p9) target = $region8
  $region5: #{dc_generator_forward.6} parent=0 // loop_body
    %s13 = ssub.s32 %s8, 1
    %s14 = ssub.s32 %s8, 2
    %s15 = sadd.s32 %s8, 1
    %s16 = ssub.s32 %s8, %s15
    %p17 = scmp.eq.s32.totalorder %s16, 0
    %s19 = sadd.s32 %s18, 1
    %s20 = scalar_select %p17, %s18, %s19
    %p23 = pneg %p17
    %p24 = scmp.eq.s32.totalorder %s8, 1
    %p25 = por %p23, %p24
    %p26 = scmp.ne.s32.totalorder %s18, %s21
    %p27 = scmp.eq.s32.totalorder %s8, 0
    %p28 = por %p26, %p27
    %p29 = scmp.ne.s32.totalorder %s18, %s21
    %p30 = scmp.eq.s32.totalorder %s13, 1
    %p31 = por %p29, %p30
    %p32 = scmp.ne.s32.totalorder %s21, %s22
    %p33 = scmp.eq.s32.totalorder %s13, 0
    %p34 = por %p32, %p33
    %p35 = scmp.ne.s32.totalorder %s21, %s22
    %p36 = scmp.eq.s32.totalorder %s14, 1
    %p37 = por %p35, %p36
    %p39 = scmp.ne.s32.totalorder %s22, %s38
    %p40 = scmp.eq.s32.totalorder %s14, 0
    %p41 = por %p39, %p40
    %s43 = sadd.s32 %s42, 1
    %p46 = scmp.eq.s32.totalorder %s8, 1
    %p47 = scmp.ne.s32.totalorder %s42, %s44
    %p48 = scmp.eq.s32.totalorder %s8, 0
    %p49 = por %p47, %p48
    %p50 = scmp.ne.s32.totalorder %s42, %s44
    %p51 = scmp.eq.s32.totalorder %s13, 1
    %p52 = por %p50, %p51
    %p53 = scmp.ne.s32.totalorder %s44, %s45
    %p54 = scmp.eq.s32.totalorder %s13, 0
    %p55 = por %p53, %p54
    %p56 = scmp.ne.s32.totalorder %s44, %s45
    %p57 = scmp.eq.s32.totalorder %s14, 1
    %p58 = por %p56, %p57
    %p60 = scmp.ne.s32.totalorder %s45, %s59
    %p61 = scmp.eq.s32.totalorder %s14, 0
    %p62 = por %p60, %p61
    %s63 = ssub.s32 %s8, %s15
    %p64 = scmp.eq.s32.totalorder %s63, 0
    %s66 = sadd.s32 %s65, 1
    %s67 = scalar_select %p64, %s65, %s66
    %p70 = pneg %p64
    %p71 = scmp.eq.s32.totalorder %s8, 1
    %p72 = por %p70, %p71
    %p73 = scmp.ne.s32.totalorder %s65, %s68
    %p74 = scmp.eq.s32.totalorder %s8, 0
    %p75 = por %p73, %p74
    %p76 = scmp.ne.s32.totalorder %s65, %s68
    %p77 = scmp.eq.s32.totalorder %s13, 1
    %p78 = por %p76, %p77
    %p79 = scmp.ne.s32.totalorder %s68, %s69
    %p80 = scmp.eq.s32.totalorder %s13, 0
    %p81 = por %p79, %p80
    %p82 = scmp.ne.s32.totalorder %s68, %s69
    %p83 = scmp.eq.s32.totalorder %s14, 1
    %p84 = por %p82, %p83
    %p86 = scmp.ne.s32.totalorder %s69, %s85
    %p87 = scmp.eq.s32.totalorder %s14, 0
    %p88 = por %p86, %p87
    %p89 = scmp.le.s32.totalorder 1, %s8
    %p90 = scmp.lt.s32.totalorder %s8, 3
    %p91 = pnand %p89, %p90
    %p92 = pneg %p91
    // Predicated region
    $region9: #{dc_generator_forward.6} parent=5 // pred_check
      _
    $region10: #{dc_generator_forward.6} parent=5 // pred_check_branch
      %94 = sbr.rel (%p91) target = $region12
    $region11: #{dc_generator_forward.6} parent=5 // pred_region
      %s95 = ssub.s32 %s8, 1
      // Predicated region
      $region13: #{dc_generator_forward.6} parent=11 // pred_check
        %p96 = pneg %p55
      $region14: #{dc_generator_forward.6} parent=11 // pred_check_branch
        %98 = sbr.rel (%p96) target = $region16
      $region15: #{dc_generator_forward.6} parent=11 // pred_region
        _
      $region16: #{dc_generator_forward.6} parent=11 // pred_fallthru
        _
    $region12: #{dc_generator_forward.6} parent=5 // pred_fallthru
      _
    %p99 = scmp.lt.s32.totalorder %s8, 2
    // Predicated region
    $region17: #{dc_generator_forward.6} parent=5 // pred_check
      %p100 = pneg %p99
    $region18: #{dc_generator_forward.6} parent=5 // pred_check_branch
      %102 = sbr.rel (%p100) target = $region20
    $region19: #{dc_generator_forward.6} parent=5 // pred_region
      // Predicated region
      $region21: #{dc_generator_forward.6} parent=19 // pred_check
        %p103 = pneg %p28
      $region22: #{dc_generator_forward.6} parent=19 // pred_check_branch
        %105 = sbr.rel (%p103) target = $region24
      $region23: #{dc_generator_forward.6} parent=19 // pred_region
        %s106 = smul.u32 38, %s8
        %p107 = scmp.lt.s32.totalorder %s106, 75
        %s108 = scalar_select %p107, %s106, 75
        %s109 = smul.addr %s108, 4
        %s110 = scalar_lea.vmem %s0, %s109
        %s111 = smul.u32 38, %s8
      $region24: #{dc_generator_forward.6} parent=19 // pred_fallthru
        _
    $region20: #{dc_generator_forward.6} parent=5 // pred_fallthru
      _
    %p112 = scmp.le.s32.totalorder 1, %s8
    %p113 = scmp.lt.s32.totalorder %s8, 3
    %p114 = pnand %p112, %p113
    %p115 = pneg %p114
    // Predicated region
    $region25: #{dc_generator_forward.6} parent=5 // pred_check
      _
    $region26: #{dc_generator_forward.6} parent=5 // pred_check_branch
      %117 = sbr.rel (%p114) target = $region28
    $region27: #{dc_generator_forward.6} parent=5 // pred_region
      %s118 = ssub.s32 %s8, 1
      %s119 = smul.u32 38, %s13
      %p120 = scmp.lt.s32.totalorder %s119, 75
      %s121 = scalar_select %p120, %s119, 75
      %s122 = smul.addr %s121, 4
      %s123 = scalar_lea.vmem %s0, %s122
      %p124 = pneg %p34
      %p125 = pneg %p31
      %p126 = pneg %p55
      %p127 = pneg %p52
      %p128 = pneg %p81
      %p129 = pneg %p78
      %s130 = smul.u32 38, %s13
      %p131 = scmp.lt.s32.totalorder %s130, 75
      %s132 = scalar_select %p131, %s130, 75
      %s133 = smul.addr %s132, 8
      %s134 = scalar_lea.vmem %s2, %s133
      %s135 = smul.u32 38, %s13
      %p136 = scmp.lt.s32.totalorder %s135, 75
      %s137 = scalar_select %p136, %s135, 75
      %s138 = smul.addr %s137, 4
      %s139 = scalar_lea.vmem %s0, %s138
      %s140 = smul.u32 38, %s13
      %s141 = smul.u32 38, %s13
      %p142 = scmp.lt.s32.totalorder %s141, 75
      %s143 = scalar_select %p142, %s141, 75
      %s144 = smul.addr %s143, 8
      %s145 = scalar_lea.vmem %s2, %s144
      %s146 = smul.u32 38, %s13
      %v148 = vld [vmem:[%s139] sm:$0xf]
      %v149 = vld [vmem:[%s139 + $0x4] sm:$0xf]
      %v150 = vld [vmem:[%s139 + $0x8] sm:$0xf]
      %v151 = vld [vmem:[%s139 + $0xc] sm:$0xf]
      %v152 = vld [vmem:[%s139 + $0x10] sm:$0xf]
      %v153 = vld [vmem:[%s139 + $0x14] sm:$0xf]
      %v154 = vld [vmem:[%s139 + $0x18] sm:$0xf]
      %v155 = vld [vmem:[%s139 + $0x1c] sm:$0xf]
      %v156 = vld [vmem:[%s139 + $0x20] sm:$0xf]
      %v157 = vld [vmem:[%s139 + $0x24] sm:$0xf]
      %v158 = vld [vmem:[%s139 + $0x28] sm:$0xf]
      %v159 = vld [vmem:[%s139 + $0x2c] sm:$0xf]
      %v160 = vld [vmem:[%s139 + $0x30] sm:$0xf]
      %v161 = vld [vmem:[%s139 + $0x34] sm:$0xf]
      %v162 = vld [vmem:[%s139 + $0x38] sm:$0xf]
      %v163 = vld [vmem:[%s139 + $0x3c] sm:$0xf]
      %v164 = vld [vmem:[%s139 + $0x40] sm:$0xf]
      %v165 = vld [vmem:[%s139 + $0x44] sm:$0xf]
      %v166 = vld [vmem:[%s139 + $0x48] sm:$0xf]
      %v167 = vld [vmem:[%s139 + $0x4c] sm:$0xf]
      %v168 = vld [vmem:[%s139 + $0x50] sm:$0xf]
      %v169 = vld [vmem:[%s139 + $0x54] sm:$0xf]
      %v170 = vld [vmem:[%s139 + $0x58] sm:$0xf]
      %v171 = vld [vmem:[%s139 + $0x5c] sm:$0xf]
      %v172 = vld [vmem:[%s139 + $0x60] sm:$0xf]
      %v173 = vld [vmem:[%s139 + $0x64] sm:$0xf]
      %v174 = vld [vmem:[%s139 + $0x68] sm:$0xf]
      %v175 = vld [vmem:[%s139 + $0x6c] sm:$0xf]
      %v176 = vld [vmem:[%s139 + $0x70] sm:$0xf]
      %v177 = vld [vmem:[%s139 + $0x74] sm:$0xf]
      %v178 = vld [vmem:[%s139 + $0x78] sm:$0xf]
      %v179 = vld [vmem:[%s139 + $0x7c] sm:$0xf]
      %v180 = vld [vmem:[%s139 + $0x80] sm:$0xf]
      %v181 = vld [vmem:[%s139 + $0x84] sm:$0xf]
      %v182 = vld [vmem:[%s139 + $0x88] sm:$0xf]
      %v183 = vld [vmem:[%s139 + $0x8c] sm:$0xf]
      %v184 = vld [vmem:[%s139 + $0x90] sm:$0xf]
      %v185 = vld [vmem:[%s139 + $0x94] sm:$0xf]
      %v186 = vld [vmem:[%s1] sm:$0xf]
      %v187 = vld [vmem:[%s1 + $0x4] sm:$0xf]
      %v188 = vld [vmem:[%s1 + $0x8] sm:$0xf]
      %v189 = vld [vmem:[%s1 + $0xc] sm:$0xf]
      %v190 = vld [vmem:[%s1 + $0x10] sm:$0xf]
      %v191 = vld [vmem:[%s1 + $0x14] sm:$0xf]
      %v192 = vld [vmem:[%s1 + $0x18] sm:$0xf]
      %v193 = vld [vmem:[%s1 + $0x1c] sm:$0xf]
      %v194 = vld [vmem:[%s1 + $0x20] sm:$0xf]
      %v195 = vld [vmem:[%s1 + $0x24] sm:$0xf]
      %v196 = vld [vmem:[%s1 + $0x28] sm:$0xf]
      %v197 = vld [vmem:[%s1 + $0x2c] sm:$0xf]
      %v198 = vld [vmem:[%s1 + $0x30] sm:$0xf]
      %v199 = vld [vmem:[%s1 + $0x34] sm:$0xf]
      %v200 = vld [vmem:[%s1 + $0x38] sm:$0xf]
      %v201 = vld [vmem:[%s1 + $0x3c] sm:$0xf]
      %v240 = vunpack.c.l.b16 %v148
      %v241 = vunpack.c.l.b16 %v149
      %v242 = vunpack.c.l.b16 %v150
      %v243 = vunpack.c.l.b16 %v151
      %v244 = vunpack.c.l.b16 %v152
      %v245 = vunpack.c.l.b16 %v153
      %v246 = vunpack.c.l.b16 %v154
      %v247 = vunpack.c.l.b16 %v155
      %v248 = vunpack.c.l.b16 %v156
      %v249 = vunpack.c.l.b16 %v157
      %v250 = vunpack.c.l.b16 %v158
      %v251 = vunpack.c.l.b16 %v159
      %v252 = vunpack.c.l.b16 %v160
      %v253 = vunpack.c.l.b16 %v161
      %v254 = vunpack.c.l.b16 %v162
      %v255 = vunpack.c.l.b16 %v163
      %v256 = vunpack.c.l.b16 %v164
      %v257 = vunpack.c.l.b16 %v165
      %v258 = vunpack.c.l.b16 %v166
      %v259 = vunpack.c.l.b16 %v167
      %v260 = vunpack.c.l.b16 %v168
      %v261 = vunpack.c.l.b16 %v169
      %v262 = vunpack.c.l.b16 %v170
      %v263 = vunpack.c.l.b16 %v171
      %v264 = vunpack.c.l.b16 %v172
      %v265 = vunpack.c.l.b16 %v173
      %v266 = vunpack.c.l.b16 %v174
      %v267 = vunpack.c.l.b16 %v175
      %v268 = vunpack.c.l.b16 %v176
      %v269 = vunpack.c.l.b16 %v177
      %v270 = vunpack.c.l.b16 %v178
      %v271 = vunpack.c.l.b16 %v179
      %v272 = vunpack.c.l.b16 %v180
      %v273 = vunpack.c.l.b16 %v181
      %v274 = vunpack.c.l.b16 %v182
      %v275 = vunpack.c.l.b16 %v183
      %v276 = vunpack.c.l.b16 %v184
      %v277 = vunpack.c.l.b16 %v185
      %v278 = vpack.c.b16 %v241, %v240
      %v279 = vpack.c.b16 %v243, %v242
      %v280 = vpack.c.b16 %v245, %v244
      %v281 = vpack.c.b16 %v247, %v246
      %v282 = vpack.c.b16 %v249, %v248
      %v283 = vpack.c.b16 %v251, %v250
      %v284 = vpack.c.b16 %v253, %v252
      %v285 = vpack.c.b16 %v255, %v254
      %v286 = vpack.c.b16 %v257, %v256
      %v287 = vpack.c.b16 %v259, %v258
      %v288 = vpack.c.b16 %v261, %v260
      %v289 = vpack.c.b16 %v263, %v262
      %v290 = vpack.c.b16 %v265, %v264
      %v291 = vpack.c.b16 %v267, %v266
      %v292 = vpack.c.b16 %v269, %v268
      %v293 = vpack.c.b16 %v271, %v270
      %v294 = vpack.c.b16 %v273, %v272
      %v295 = vpack.c.b16 %v275, %v274
      %v296 = vpack.c.b16 %v277, %v276
      %v332 = vunpack.c.l.b16 %v186
      %v333 = vunpack.c.l.b16 %v187
      %v334 = vunpack.c.l.b16 %v188
      %v335 = vunpack.c.l.b16 %v189
      %v336 = vunpack.c.l.b16 %v190
      %v337 = vunpack.c.l.b16 %v191
      %v338 = vunpack.c.l.b16 %v192
      %v339 = vunpack.c.l.b16 %v193
      %v340 = vunpack.c.l.b16 %v194
      %v341 = vunpack.c.l.b16 %v195
      %v342 = vunpack.c.l.b16 %v196
      %v343 = vunpack.c.l.b16 %v197
      %v344 = vunpack.c.l.b16 %v198
      %v345 = vunpack.c.l.b16 %v199
      %v346 = vunpack.c.l.b16 %v200
      %v347 = vunpack.c.l.b16 %v201
      %v348 = vpack.c.b16 %v333, %v332
      %v349 = vpack.c.b16 %v335, %v334
      %v350 = vpack.c.b16 %v337, %v336
      %v351 = vpack.c.b16 %v339, %v338
      %v352 = vpack.c.b16 %v341, %v340
      %v353 = vpack.c.b16 %v343, %v342
      %v354 = vpack.c.b16 %v345, %v344
      %v355 = vpack.c.b16 %v347, %v346
      %364 = vmatprep.subr.bf16.mxu0 0
      %365 = vmatpush1.bf16.msra.mxu0 %v348
      %366 = vmatprep.subr.bf16.mxu0 0
      %367 = vmatpush1.bf16.msra.mxu0 %v349
      %368 = vmatprep.subr.bf16.mxu0 0
      %369 = vmatpush1.bf16.msra.mxu0 %v350
      %370 = vmatprep.subr.bf16.mxu0 0
      %371 = vmatpush1.bf16.msra.mxu0 %v351
      %372 = vmatprep.subr.bf16.mxu0 0
      %373 = vmatpush1.bf16.msra.mxu0 %v352
      %374 = vmatprep.subr.bf16.mxu0 0
      %375 = vmatpush1.bf16.msra.mxu0 %v353
      %376 = vmatprep.subr.bf16.mxu0 0
      %377 = vmatpush1.bf16.msra.mxu0 %v354
      %378 = vmatprep.subr.bf16.mxu0 0
      %379 = vmatpush1.bf16.msra.mxu0 %v355
      %380 = vmatprep.subr.bf16.mxu0 0
      %381 = vmatpush1.bf16.msra.mxu0 0
      %382 = vmatprep.subr.bf16.mxu0 0
      %383 = vmatpush1.bf16.msra.mxu0 0
      %384 = vmatprep.subr.bf16.mxu0 0
      %385 = vmatpush1.bf16.msra.mxu0 0
      %386 = vmatprep.subr.bf16.mxu0 0
      %387 = vmatpush1.bf16.msra.mxu0 0
      %388 = vmatprep.subr.bf16.mxu0 0
      %389 = vmatpush1.bf16.msra.mxu0 0
      %390 = vmatprep.subr.bf16.mxu0 0
      %391 = vmatpush1.bf16.msra.mxu0 0
      %392 = vmatprep.subr.bf16.mxu0 0
      %393 = vmatpush1.bf16.msra.mxu0 0
      %394 = vmatprep.subr.bf16.mxu0 0
      %395 = vmatpush1.bf16.msra.mxu0 0
      %396 = vmatprep.mubr.bf16.mxu0 0
      %397 = vmatmul.mubr.bf16.gmra.mrb[0].mxu0 %v278
      %v398 = vpop.f32.mrb[0].mxu0
      %v399 = vadd.f32 0.0, %v398
      %v400 = vpop.f32.mrb[0].mxu0
      %v401 = vpop.f32.mrb[0].mxu0
      %v402 = vadd.f32 0.0, %v401
      %v403 = vpop.f32.mrb[0].mxu0
      %404 = vmatprep.mubr.bf16.mxu0 0
      %405 = vmatmul.mubr.bf16.gmra.mrb[0].mxu0 %v279
      %v406 = vpop.f32.mrb[0].mxu0
      %v407 = vadd.f32 0.0, %v406
      %v408 = vpop.f32.mrb[0].mxu0
      %v409 = vpop.f32.mrb[0].mxu0
      %v410 = vadd.f32 0.0, %v409
      %v411 = vpop.f32.mrb[0].mxu0
      %412 = vmatprep.mubr.bf16.mxu0 0
      %413 = vmatmul.mubr.bf16.gmra.mrb[0].mxu0 %v280
      %v414 = vpop.f32.mrb[0].mxu0
      %v415 = vadd.f32 0.0, %v414
      %v416 = vpop.f32.mrb[0].mxu0
      %v417 = vpop.f32.mrb[0].mxu0
      %v418 = vadd.f32 0.0, %v417
      %v419 = vpop.f32.mrb[0].mxu0
      %420 = vmatprep.mubr.bf16.mxu0 0
      %421 = vmatmul.mubr.bf16.gmra.mrb[0].mxu0 %v281
      %v422 = vpop.f32.mrb[0].mxu0
      %v423 = vadd.f32 0.0, %v422
      %v424 = vpop.f32.mrb[0].mxu0
      %v425 = vpop.f32.mrb[0].mxu0
      %v426 = vadd.f32 0.0, %v425
      %v427 = vpop.f32.mrb[0].mxu0
      %428 = vmatprep.mubr.bf16.mxu0 0
      %429 = vmatmul.mubr.bf16.gmra.mrb[0].mxu0 %v282
      %v430 = vpop.f32.mrb[0].mxu0
      %v431 = vadd.f32 0.0, %v430
      %v432 = vpop.f32.mrb[0].mxu0
      %v433 = vpop.f32.mrb[0].mxu0
      %v434 = vadd.f32 0.0, %v433
      %v435 = vpop.f32.mrb[0].mxu0
      %436 = vmatprep.mubr.bf16.mxu0 0
      %437 = vmatmul.mubr.bf16.gmra.mrb[0].mxu0 %v283
      %v438 = vpop.f32.mrb[0].mxu0
      %v439 = vadd.f32 0.0, %v438
      %v440 = vpop.f32.mrb[0].mxu0
      %v441 = vpop.f32.mrb[0].mxu0
      %v442 = vadd.f32 0.0, %v441
      %v443 = vpop.f32.mrb[0].mxu0
      %444 = vmatprep.mubr.bf16.mxu0 0
      %445 = vmatmul.mubr.bf16.gmra.mrb[0].mxu0 %v284
      %v446 = vpop.f32.mrb[0].mxu0
      %v447 = vadd.f32 0.0, %v446
      %v448 = vpop.f32.mrb[0].mxu0
      %v449 = vpop.f32.mrb[0].mxu0
      %v450 = vadd.f32 0.0, %v449
      %v451 = vpop.f32.mrb[0].mxu0
      %452 = vmatprep.mubr.bf16.mxu0 0
      %453 = vmatmul.mubr.bf16.gmra.mrb[0].mxu0 %v285
      %v454 = vpop.f32.mrb[0].mxu0
      %v455 = vadd.f32 0.0, %v454
      %v456 = vpop.f32.mrb[0].mxu0
      %v457 = vpop.f32.mrb[0].mxu0
      %v458 = vadd.f32 0.0, %v457
      %v459 = vpop.f32.mrb[0].mxu0
      %460 = vmatprep.mubr.bf16.mxu0 0
      %461 = vmatmul.mubr.bf16.gmra.mrb[0].mxu0 %v286
      %v462 = vpop.f32.mrb[0].mxu0
      %v463 = vadd.f32 0.0, %v462
      %v464 = vpop.f32.mrb[0].mxu0
      %v465 = vpop.f32.mrb[0].mxu0
      %v466 = vadd.f32 0.0, %v465
      %v467 = vpop.f32.mrb[0].mxu0
      %468 = vmatprep.mubr.bf16.mxu0 0
      %469 = vmatmul.mubr.bf16.gmra.mrb[0].mxu0 %v287
      %v470 = vpop.f32.mrb[0].mxu0
      %v471 = vadd.f32 0.0, %v470
      %v472 = vpop.f32.mrb[0].mxu0
      %v473 = vpop.f32.mrb[0].mxu0
      %v474 = vadd.f32 0.0, %v473
      %v475 = vpop.f32.mrb[0].mxu0
      %476 = vmatprep.mubr.bf16.mxu0 0
      %477 = vmatmul.mubr.bf16.gmra.mrb[0].mxu0 %v288
      %v478 = vpop.f32.mrb[0].mxu0
      %v479 = vadd.f32 0.0, %v478
      %v480 = vpop.f32.mrb[0].mxu0
      %v481 = vpop.f32.mrb[0].mxu0
      %v482 = vadd.f32 0.0, %v481
      %v483 = vpop.f32.mrb[0].mxu0
      %484 = vmatprep.mubr.bf16.mxu0 0
      %485 = vmatmul.mubr.bf16.gmra.mrb[0].mxu0 %v289
      %v486 = vpop.f32.mrb[0].mxu0
      %v487 = vadd.f32 0.0, %v486
      %v488 = vpop.f32.mrb[0].mxu0
      %v489 = vpop.f32.mrb[0].mxu0
      %v490 = vadd.f32 0.0, %v489
      %v491 = vpop.f32.mrb[0].mxu0
      %492 = vmatprep.mubr.bf16.mxu0 0
      %493 = vmatmul.mubr.bf16.gmra.mrb[0].mxu0 %v290
      %v494 = vpop.f32.mrb[0].mxu0
      %v495 = vadd.f32 0.0, %v494
      %v496 = vpop.f32.mrb[0].mxu0
      %v497 = vpop.f32.mrb[0].mxu0
      %v498 = vadd.f32 0.0, %v497
      %v499 = vpop.f32.mrb[0].mxu0
      %500 = vmatprep.mubr.bf16.mxu0 0
      %501 = vmatmul.mubr.bf16.gmra.mrb[0].mxu0 %v291
      %v502 = vpop.f32.mrb[0].mxu0
      %v503 = vadd.f32 0.0, %v502
      %v504 = vpop.f32.mrb[0].mxu0
      %v505 = vpop.f32.mrb[0].mxu0
      %v506 = vadd.f32 0.0, %v505
      %v507 = vpop.f32.mrb[0].mxu0
      %508 = vmatprep.mubr.bf16.mxu0 0
      %509 = vmatmul.mubr.bf16.gmra.mrb[0].mxu0 %v292
      %v510 = vpop.f32.mrb[0].mxu0
      %v511 = vadd.f32 0.0, %v510
      %v512 = vpop.f32.mrb[0].mxu0
      %v513 = vpop.f32.mrb[0].mxu0
      %v514 = vadd.f32 0.0, %v513
      %v515 = vpop.f32.mrb[0].mxu0
      %516 = vmatprep.mubr.bf16.mxu0 0
      %517 = vmatmul.mubr.bf16.gmra.mrb[0].mxu0 %v293
      %v518 = vpop.f32.mrb[0].mxu0
      %v519 = vadd.f32 0.0, %v518
      %v520 = vpop.f32.mrb[0].mxu0
      %v521 = vpop.f32.mrb[0].mxu0
      %v522 = vadd.f32 0.0, %v521
      %v523 = vpop.f32.mrb[0].mxu0
      %524 = vmatprep.mubr.bf16.mxu0 0
      %525 = vmatmul.mubr.bf16.gmra.mrb[0].mxu0 %v294
      %v526 = vpop.f32.mrb[0].mxu0
      %v527 = vadd.f32 0.0, %v526
      %v528 = vpop.f32.mrb[0].mxu0
      %v529 = vpop.f32.mrb[0].mxu0
      %v530 = vadd.f32 0.0, %v529
      %v531 = vpop.f32.mrb[0].mxu0
      %532 = vmatprep.mubr.bf16.mxu0 0
      %533 = vmatmul.mubr.bf16.gmra.mrb[0].mxu0 %v295
      %v534 = vpop.f32.mrb[0].mxu0
      %v535 = vadd.f32 0.0, %v534
      %v536 = vpop.f32.mrb[0].mxu0
      %v537 = vpop.f32.mrb[0].mxu0
      %v538 = vadd.f32 0.0, %v537
      %v539 = vpop.f32.mrb[0].mxu0
      %540 = vmatprep.mubr.bf16.mxu0 0
      %541 = vmatmul.mubr.bf16.gmra.mrb[0].mxu0 %v296
      %v542 = vpop.f32.mrb[0].mxu0
      %v543 = vadd.f32 0.0, %v542
      %v544 = vpop.f32.mrb[0].mxu0
      %v545 = vpop.f32.mrb[0].mxu0
      %v546 = vadd.f32 0.0, %v545
      %v547 = vpop.f32.mrb[0].mxu0
      %548 = vdwg.mxu0
      %549 = vst [vmem:[%s145] sm:$0xff] %v399
      %550 = vst [vmem:[%s145 + $0x8] sm:$0xff] %v402
      %551 = vst [vmem:[%s145 + $0x10] sm:$0xff] %v407
      %552 = vst [vmem:[%s145 + $0x18] sm:$0xff] %v410
      %553 = vst [vmem:[%s145 + $0x20] sm:$0xff] %v415
      %554 = vst [vmem:[%s145 + $0x28] sm:$0xff] %v418
      %555 = vst [vmem:[%s145 + $0x30] sm:$0xff] %v423
      %556 = vst [vmem:[%s145 + $0x38] sm:$0xff] %v426
      %557 = vst [vmem:[%s145 + $0x40] sm:$0xff] %v431
      %558 = vst [vmem:[%s145 + $0x48] sm:$0xff] %v434
      %559 = vst [vmem:[%s145 + $0x50] sm:$0xff] %v439
      %560 = vst [vmem:[%s145 + $0x58] sm:$0xff] %v442
      %561 = vst [vmem:[%s145 + $0x60] sm:$0xff] %v447
      %562 = vst [vmem:[%s145 + $0x68] sm:$0xff] %v450
      %563 = vst [vmem:[%s145 + $0x70] sm:$0xff] %v455
      %564 = vst [vmem:[%s145 + $0x78] sm:$0xff] %v458
      %565 = vst [vmem:[%s145 + $0x80] sm:$0xff] %v463
      %566 = vst [vmem:[%s145 + $0x88] sm:$0xff] %v466
      %567 = vst [vmem:[%s145 + $0x90] sm:$0xff] %v471
      %568 = vst [vmem:[%s145 + $0x98] sm:$0xff] %v474
      %569 = vst [vmem:[%s145 + $0xa0] sm:$0xff] %v479
      %570 = vst [vmem:[%s145 + $0xa8] sm:$0xff] %v482
      %571 = vst [vmem:[%s145 + $0xb0] sm:$0xff] %v487
      %572 = vst [vmem:[%s145 + $0xb8] sm:$0xff] %v490
      %573 = vst [vmem:[%s145 + $0xc0] sm:$0xff] %v495
      %574 = vst [vmem:[%s145 + $0xc8] sm:$0xff] %v498
      %575 = vst [vmem:[%s145 + $0xd0] sm:$0xff] %v503
      %576 = vst [vmem:[%s145 + $0xd8] sm:$0xff] %v506
      %577 = vst [vmem:[%s145 + $0xe0] sm:$0xff] %v511
      %578 = vst [vmem:[%s145 + $0xe8] sm:$0xff] %v514
      %579 = vst [vmem:[%s145 + $0xf0] sm:$0xff] %v519
      %580 = vst [vmem:[%s145 + $0xf8] sm:$0xff] %v522
      %581 = vst [vmem:[%s145 + $0x100] sm:$0xff] %v527
      %582 = vst [vmem:[%s145 + $0x108] sm:$0xff] %v530
      %583 = vst [vmem:[%s145 + $0x110] sm:$0xff] %v535
      %584 = vst [vmem:[%s145 + $0x118] sm:$0xff] %v538
      %585 = vst [vmem:[%s145 + $0x120] sm:$0xff] %v543
      %586 = vst [vmem:[%s145 + $0x128] sm:$0xff] %v546
      %s587 = smul.u32 38, %s13
      %p588 = scmp.lt.s32.totalorder %s587, 75
      %s589 = scalar_select %p588, %s587, 75
      %s590 = smul.addr %s589, 8
      %s591 = scalar_lea.vmem %s2, %s590
      // Predicated region
      $region29: #{dc_generator_forward.6} parent=27 // pred_check
        %p592 = pneg %p78
      $region30: #{dc_generator_forward.6} parent=27 // pred_check_branch
        %594 = sbr.rel (%p592) target = $region32
      $region31: #{dc_generator_forward.6} parent=27 // pred_region
        %s595 = smul.u32 38, %s13
      $region32: #{dc_generator_forward.6} parent=27 // pred_fallthru
        _
    $region28: #{dc_generator_forward.6} parent=5 // pred_fallthru
      _
    %p596 = scmp.le.s32.totalorder 2, %s8
    // Predicated region
    $region33: #{dc_generator_forward.6} parent=5 // pred_check
      %p597 = pneg %p596
    $region34: #{dc_generator_forward.6} parent=5 // pred_check_branch
      %599 = sbr.rel (%p597) target = $region36
    $region35: #{dc_generator_forward.6} parent=5 // pred_region
      %s600 = ssub.s32 %s8, 2
      // Predicated region
      $region37: #{dc_generator_forward.6} parent=35 // pred_check
        %p601 = pneg %p84
      $region38: #{dc_generator_forward.6} parent=35 // pred_check_branch
        %603 = sbr.rel (%p601) target = $region40
      $region39: #{dc_generator_forward.6} parent=35 // pred_region
        %s604 = smul.u32 38, %s14
        %p605 = scmp.lt.s32.totalorder %s604, 75
        %s606 = scalar_select %p605, %s604, 75
        %s607 = smul.addr %s606, 8
        %s608 = scalar_lea.vmem %s2, %s607
      $region40: #{dc_generator_forward.6} parent=35 // pred_fallthru
        _
    $region36: #{dc_generator_forward.6} parent=5 // pred_fallthru
      _
  $region6: #{dc_generator_forward.6} parent=0 // loop_footer
    %s12 = sadd.s32 1, %s8
  $region7: #{dc_generator_forward.6} parent=0 // loop_footer_branch
    %7 = sbr.rel target = $region3
  $region8: #{dc_generator_forward.6} parent=0 // loop_exit
    _

// kernel: dc_generator_forward.7
$region0: #{dc_generator_forward.7}
  #allocation0 [shape = 'u32[]', space=smem, size = 0x4, offset = 0x4, fixed_abs, tag = 'smem constant byte address 0x4 - core index']
  #allocation1 [shape = 'u32[144,128]{1,0:T(1,128)}', space=vmem, size = 0x12000, scoped, tag = 'internal scratch']
  %s0 = inlined_call_operand.vmem [shape: bf16[2208,64], index: 0, kind: input, shape index: {}]
  %s1 = inlined_call_operand.vmem [shape: bf16[64,128], index: 1, kind: input, shape index: {}]
  %s2 = inlined_call_operand.vmem [shape: f32[2208,128], index: 2, kind: output, shape index: {}]
  %s3 = sld [smem:[#allocation0]]
  $region41: #{dc_generator_forward.7} parent=0
    _
  %s5 = ssub.s32 1, %s3
  %s6 = scalar_select 0, %s5, %s3
  loop: start=0, step=1, limit=5
  $region2: #{dc_generator_forward.7} parent=0 // loop_pre_header
    _
  $region3: #{dc_generator_forward.7} parent=0 // loop_header
    %s8 = sphi 0, %s12
    %p9 = scmp.ge.s32.totalorder %s8, 5
    %s18 = sphi 0, %s20
    %s21 = sphi 0, %s18
    %s22 = sphi 0, %s21
    %s38 = sphi 0, %s22
    %s42 = sphi 0, %s42
    %s44 = sphi 0, %s42
    %s45 = sphi 0, %s44
    %s59 = sphi 0, %s45
    %s65 = sphi 0, %s67
    %s68 = sphi 0, %s65
    %s69 = sphi 0, %s68
    %s85 = sphi 0, %s69
  $region4: #{dc_generator_forward.7} parent=0 // loop_header_branch
    %11 = sbr.rel (%p9) target = $region8
  $region5: #{dc_generator_forward.7} parent=0 // loop_body
    %s13 = ssub.s32 %s8, 1
    %s14 = ssub.s32 %s8, 2
    %s15 = sadd.s32 %s8, 1
    %s16 = ssub.s32 %s8, %s15
    %p17 = scmp.eq.s32.totalorder %s16, 0
    %s19 = sadd.s32 %s18, 1
    %s20 = scalar_select %p17, %s18, %s19
    %p23 = pneg %p17
    %p24 = scmp.eq.s32.totalorder %s8, 2
    %p25 = por %p23, %p24
    %p26 = scmp.ne.s32.totalorder %s18, %s21
    %p27 = scmp.eq.s32.totalorder %s8, 0
    %p28 = por %p26, %p27
    %p29 = scmp.ne.s32.totalorder %s18, %s21
    %p30 = scmp.eq.s32.totalorder %s13, 2
    %p31 = por %p29, %p30
    %p32 = scmp.ne.s32.totalorder %s21, %s22
    %p33 = scmp.eq.s32.totalorder %s13, 0
    %p34 = por %p32, %p33
    %p35 = scmp.ne.s32.totalorder %s21, %s22
    %p36 = scmp.eq.s32.totalorder %s14, 2
    %p37 = por %p35, %p36
    %p39 = scmp.ne.s32.totalorder %s22, %s38
    %p40 = scmp.eq.s32.totalorder %s14, 0
    %p41 = por %p39, %p40
    %s43 = sadd.s32 %s42, 1
    %p46 = scmp.eq.s32.totalorder %s8, 2
    %p47 = scmp.ne.s32.totalorder %s42, %s44
    %p48 = scmp.eq.s32.totalorder %s8, 0
    %p49 = por %p47, %p48
    %p50 = scmp.ne.s32.totalorder %s42, %s44
    %p51 = scmp.eq.s32.totalorder %s13, 2
    %p52 = por %p50, %p51
    %p53 = scmp.ne.s32.totalorder %s44, %s45
    %p54 = scmp.eq.s32.totalorder %s13, 0
    %p55 = por %p53, %p54
    %p56 = scmp.ne.s32.totalorder %s44, %s45
    %p57 = scmp.eq.s32.totalorder %s14, 2
    %p58 = por %p56, %p57
    %p60 = scmp.ne.s32.totalorder %s45, %s59
    %p61 = scmp.eq.s32.totalorder %s14, 0
    %p62 = por %p60, %p61
    %s63 = ssub.s32 %s8, %s15
    %p64 = scmp.eq.s32.totalorder %s63, 0
    %s66 = sadd.s32 %s65, 1
    %s67 = scalar_select %p64, %s65, %s66
    %p70 = pneg %p64
    %p71 = scmp.eq.s32.totalorder %s8, 2
    %p72 = por %p70, %p71
    %p73 = scmp.ne.s32.totalorder %s65, %s68
    %p74 = scmp.eq.s32.totalorder %s8, 0
    %p75 = por %p73, %p74
    %p76 = scmp.ne.s32.totalorder %s65, %s68
    %p77 = scmp.eq.s32.totalorder %s13, 2
    %p78 = por %p76, %p77
    %p79 = scmp.ne.s32.totalorder %s68, %s69
    %p80 = scmp.eq.s32.totalorder %s13, 0
    %p81 = por %p79, %p80
    %p82 = scmp.ne.s32.totalorder %s68, %s69
    %p83 = scmp.eq.s32.totalorder %s14, 2
    %p84 = por %p82, %p83
    %p86 = scmp.ne.s32.totalorder %s69, %s85
    %p87 = scmp.eq.s32.totalorder %s14, 0
    %p88 = por %p86, %p87
    %p89 = scmp.le.s32.totalorder 1, %s8
    %p90 = scmp.lt.s32.totalorder %s8, 4
    %p91 = pnand %p89, %p90
    %p92 = pneg %p91
    // Predicated region
    $region9: #{dc_generator_forward.7} parent=5 // pred_check
      _
    $region10: #{dc_generator_forward.7} parent=5 // pred_check_branch
      %94 = sbr.rel (%p91) target = $region12
    $region11: #{dc_generator_forward.7} parent=5 // pred_region
      %s95 = ssub.s32 %s8, 1
      // Predicated region
      $region13: #{dc_generator_forward.7} parent=11 // pred_check
        %p96 = pneg %p55
      $region14: #{dc_generator_forward.7} parent=11 // pred_check_branch
        %98 = sbr.rel (%p96) target = $region16
      $region15: #{dc_generator_forward.7} parent=11 // pred_region
        _
      $region16: #{dc_generator_forward.7} parent=11 // pred_fallthru
        _
    $region12: #{dc_generator_forward.7} parent=5 // pred_fallthru
      _
    %p99 = scmp.lt.s32.totalorder %s8, 3
    // Predicated region
    $region17: #{dc_generator_forward.7} parent=5 // pred_check
      %p100 = pneg %p99
    $region18: #{dc_generator_forward.7} parent=5 // pred_check_branch
      %102 = sbr.rel (%p100) target = $region20
    $region19: #{dc_generator_forward.7} parent=5 // pred_region
      // Predicated region
      $region21: #{dc_generator_forward.7} parent=19 // pred_check
        %p103 = pneg %p28
      $region22: #{dc_generator_forward.7} parent=19 // pred_check_branch
        %105 = sbr.rel (%p103) target = $region24
      $region23: #{dc_generator_forward.7} parent=19 // pred_region
        %s106 = smul.u32 92, %s8
        %p107 = scmp.lt.s32.totalorder %s106, 275
        %s108 = scalar_select %p107, %s106, 275
        %s109 = smul.addr %s108, 4
        %s110 = scalar_lea.vmem %s0, %s109
        %s111 = smul.u32 92, %s8
      $region24: #{dc_generator_forward.7} parent=19 // pred_fallthru
        _
    $region20: #{dc_generator_forward.7} parent=5 // pred_fallthru
      _
    %p112 = scmp.le.s32.totalorder 1, %s8
    %p113 = scmp.lt.s32.totalorder %s8, 4
    %p114 = pnand %p112, %p113
    %p115 = pneg %p114
    // Predicated region
    $region25: #{dc_generator_forward.7} parent=5 // pred_check
      _
    $region26: #{dc_generator_forward.7} parent=5 // pred_check_branch
      %117 = sbr.rel (%p114) target = $region28
    $region27: #{dc_generator_forward.7} parent=5 // pred_region
      %s118 = ssub.s32 %s8, 1
      %s119 = smul.u32 92, %s13
      %p120 = scmp.lt.s32.totalorder %s119, 275
      %s121 = scalar_select %p120, %s119, 275
      %s122 = smul.addr %s121, 4
      %s123 = scalar_lea.vmem %s0, %s122
      %p124 = pneg %p34
      %p125 = pneg %p31
      %p126 = pneg %p55
      %p127 = pneg %p52
      %p128 = pneg %p81
      %p129 = pneg %p78
      %s130 = smul.u32 92, %s13
      %p131 = scmp.lt.s32.totalorder %s130, 275
      %s132 = scalar_select %p131, %s130, 275
      %s133 = smul.addr %s132, 8
      %s134 = scalar_lea.vmem %s2, %s133
      %s135 = smul.u32 92, %s13
      %p136 = scmp.lt.s32.totalorder %s135, 275
      %s137 = scalar_select %p136, %s135, 275
      %s138 = smul.addr %s137, 4
      %s139 = scalar_lea.vmem %s0, %s138
      %s140 = smul.u32 92, %s13
      %s141 = smul.u32 92, %s13
      %p142 = scmp.lt.s32.totalorder %s141, 275
      %s143 = scalar_select %p142, %s141, 275
      %s144 = smul.addr %s143, 8
      %s145 = scalar_lea.vmem %s2, %s144
      %s146 = smul.u32 92, %s13
      %v148 = vld [vmem:[%s139] sm:$0xf]
      %v149 = vld [vmem:[%s139 + $0x4] sm:$0xf]
      %v150 = vld [vmem:[%s139 + $0x8] sm:$0xf]
      %v151 = vld [vmem:[%s139 + $0xc] sm:$0xf]
      %v152 = vld [vmem:[%s139 + $0x10] sm:$0xf]
      %v153 = vld [vmem:[%s139 + $0x14] sm:$0xf]
      %v154 = vld [vmem:[%s139 + $0x18] sm:$0xf]
      %v155 = vld [vmem:[%s139 + $0x1c] sm:$0xf]
      %v156 = vld [vmem:[%s139 + $0x20] sm:$0xf]
      %v157 = vld [vmem:[%s139 + $0x24] sm:$0xf]
      %v158 = vld [vmem:[%s139 + $0x28] sm:$0xf]
      %v159 = vld [vmem:[%s139 + $0x2c] sm:$0xf]
      %v160 = vld [vmem:[%s139 + $0x30] sm:$0xf]
      %v161 = vld [vmem:[%s139 + $0x34] sm:$0xf]
      %v162 = vld [vmem:[%s139 + $0x38] sm:$0xf]
      %v163 = vld [vmem:[%s139 + $0x3c] sm:$0xf]
      %v164 = vld [vmem:[%s139 + $0x40] sm:$0xf]
      %v165 = vld [vmem:[%s139 + $0x44] sm:$0xf]
      %v166 = vld [vmem:[%s139 + $0x48] sm:$0xf]
      %v167 = vld [vmem:[%s139 + $0x4c] sm:$0xf]
      %v168 = vld [vmem:[%s139 + $0x50] sm:$0xf]
      %v169 = vld [vmem:[%s139 + $0x54] sm:$0xf]
      %v170 = vld [vmem:[%s139 + $0x58] sm:$0xf]
      %v171 = vld [vmem:[%s139 + $0x5c] sm:$0xf]
      %v172 = vld [vmem:[%s139 + $0x60] sm:$0xf]
      %v173 = vld [vmem:[%s139 + $0x64] sm:$0xf]
      %v174 = vld [vmem:[%s139 + $0x68] sm:$0xf]
      %v175 = vld [vmem:[%s139 + $0x6c] sm:$0xf]
      %v176 = vld [vmem:[%s139 + $0x70] sm:$0xf]
      %v177 = vld [vmem:[%s139 + $0x74] sm:$0xf]
      %v178 = vld [vmem:[%s139 + $0x78] sm:$0xf]
      %v179 = vld [vmem:[%s139 + $0x7c] sm:$0xf]
      %v180 = vld [vmem:[%s139 + $0x80] sm:$0xf]
      %v181 = vld [vmem:[%s139 + $0x84] sm:$0xf]
      %v182 = vld [vmem:[%s139 + $0x88] sm:$0xf]
      %v183 = vld [vmem:[%s139 + $0x8c] sm:$0xf]
      %v184 = vld [vmem:[%s139 + $0x90] sm:$0xf]
      %v185 = vld [vmem:[%s139 + $0x94] sm:$0xf]
      %v186 = vld [vmem:[%s139 + $0x98] sm:$0xf]
      %v187 = vld [vmem:[%s139 + $0x9c] sm:$0xf]
      %v188 = vld [vmem:[%s139 + $0xa0] sm:$0xf]
      %v189 = vld [vmem:[%s139 + $0xa4] sm:$0xf]
      %v190 = vld [vmem:[%s139 + $0xa8] sm:$0xf]
      %v191 = vld [vmem:[%s139 + $0xac] sm:$0xf]
      %v192 = vld [vmem:[%s139 + $0xb0] sm:$0xf]
      %v193 = vld [vmem:[%s139 + $0xb4] sm:$0xf]
      %v194 = vld [vmem:[%s139 + $0xb8] sm:$0xf]
      %v195 = vld [vmem:[%s139 + $0xbc] sm:$0xf]
      %v196 = vld [vmem:[%s139 + $0xc0] sm:$0xf]
      %v197 = vld [vmem:[%s139 + $0xc4] sm:$0xf]
      %v198 = vld [vmem:[%s139 + $0xc8] sm:$0xf]
      %v199 = vld [vmem:[%s139 + $0xcc] sm:$0xf]
      %v200 = vld [vmem:[%s139 + $0xd0] sm:$0xf]
      %v201 = vld [vmem:[%s139 + $0xd4] sm:$0xf]
      %v202 = vld [vmem:[%s139 + $0xd8] sm:$0xf]
      %v203 = vld [vmem:[%s139 + $0xdc] sm:$0xf]
      %v204 = vld [vmem:[%s139 + $0xe0] sm:$0xf]
      %v205 = vld [vmem:[%s139 + $0xe4] sm:$0xf]
      %v206 = vld [vmem:[%s139 + $0xe8] sm:$0xf]
      %v207 = vld [vmem:[%s139 + $0xec] sm:$0xf]
      %v208 = vld [vmem:[%s139 + $0xf0] sm:$0xf]
      %v209 = vld [vmem:[%s139 + $0xf4] sm:$0xf]
      %v210 = vld [vmem:[%s139 + $0xf8] sm:$0xf]
      %v211 = vld [vmem:[%s139 + $0xfc] sm:$0xf]
      %v212 = vld [vmem:[%s139 + $0x100] sm:$0xf]
      %v213 = vld [vmem:[%s139 + $0x104] sm:$0xf]
      %v214 = vld [vmem:[%s139 + $0x108] sm:$0xf]
      %v215 = vld [vmem:[%s139 + $0x10c] sm:$0xf]
      %v216 = vld [vmem:[%s139 + $0x110] sm:$0xf]
      %v217 = vld [vmem:[%s139 + $0x114] sm:$0xf]
      %v218 = vld [vmem:[%s139 + $0x118] sm:$0xf]
      %v219 = vld [vmem:[%s139 + $0x11c] sm:$0xf]
      %v220 = vld [vmem:[%s139 + $0x120] sm:$0xf]
      %v221 = vld [vmem:[%s139 + $0x124] sm:$0xf]
      %v222 = vld [vmem:[%s139 + $0x128] sm:$0xf]
      %v223 = vld [vmem:[%s139 + $0x12c] sm:$0xf]
      %v224 = vld [vmem:[%s139 + $0x130] sm:$0xf]
      %v225 = vld [vmem:[%s139 + $0x134] sm:$0xf]
      %v226 = vld [vmem:[%s139 + $0x138] sm:$0xf]
      %v227 = vld [vmem:[%s139 + $0x13c] sm:$0xf]
      %v228 = vld [vmem:[%s139 + $0x140] sm:$0xf]
      %v229 = vld [vmem:[%s139 + $0x144] sm:$0xf]
      %v230 = vld [vmem:[%s139 + $0x148] sm:$0xf]
      %v231 = vld [vmem:[%s139 + $0x14c] sm:$0xf]
      %v232 = vld [vmem:[%s139 + $0x150] sm:$0xf]
      %v233 = vld [vmem:[%s139 + $0x154] sm:$0xf]
      %v234 = vld [vmem:[%s139 + $0x158] sm:$0xf]
      %v235 = vld [vmem:[%s139 + $0x15c] sm:$0xf]
      %v236 = vld [vmem:[%s139 + $0x160] sm:$0xf]
      %v237 = vld [vmem:[%s139 + $0x164] sm:$0xf]
      %v238 = vld [vmem:[%s139 + $0x168] sm:$0xf]
      %v239 = vld [vmem:[%s139 + $0x16c] sm:$0xf]
      %v240 = vld [vmem:[%s1] sm:$0xf]
      %v241 = vld [vmem:[%s1 + $0x4] sm:$0xf]
      %v242 = vld [vmem:[%s1 + $0x8] sm:$0xf]
      %v243 = vld [vmem:[%s1 + $0xc] sm:$0xf]
      %v244 = vld [vmem:[%s1 + $0x10] sm:$0xf]
      %v245 = vld [vmem:[%s1 + $0x14] sm:$0xf]
      %v246 = vld [vmem:[%s1 + $0x18] sm:$0xf]
      %v247 = vld [vmem:[%s1 + $0x1c] sm:$0xf]
      %v340 = vunpack.c.l.b16 %v148
      %v341 = vunpack.c.l.b16 %v149
      %v342 = vunpack.c.l.b16 %v150
      %v343 = vunpack.c.l.b16 %v151
      %v344 = vunpack.c.l.b16 %v152
      %v345 = vunpack.c.l.b16 %v153
      %v346 = vunpack.c.l.b16 %v154
      %v347 = vunpack.c.l.b16 %v155
      %v348 = vunpack.c.l.b16 %v156
      %v349 = vunpack.c.l.b16 %v157
      %v350 = vunpack.c.l.b16 %v158
      %v351 = vunpack.c.l.b16 %v159
      %v352 = vunpack.c.l.b16 %v160
      %v353 = vunpack.c.l.b16 %v161
      %v354 = vunpack.c.l.b16 %v162
      %v355 = vunpack.c.l.b16 %v163
      %v356 = vunpack.c.l.b16 %v164
      %v357 = vunpack.c.l.b16 %v165
      %v358 = vunpack.c.l.b16 %v166
      %v359 = vunpack.c.l.b16 %v167
      %v360 = vunpack.c.l.b16 %v168
      %v361 = vunpack.c.l.b16 %v169
      %v362 = vunpack.c.l.b16 %v170
      %v363 = vunpack.c.l.b16 %v171
      %v364 = vunpack.c.l.b16 %v172
      %v365 = vunpack.c.l.b16 %v173
      %v366 = vunpack.c.l.b16 %v174
      %v367 = vunpack.c.l.b16 %v175
      %v368 = vunpack.c.l.b16 %v176
      %v369 = vunpack.c.l.b16 %v177
      %v370 = vunpack.c.l.b16 %v178
      %v371 = vunpack.c.l.b16 %v179
      %v372 = vunpack.c.l.b16 %v180
      %v373 = vunpack.c.l.b16 %v181
      %v374 = vunpack.c.l.b16 %v182
      %v375 = vunpack.c.l.b16 %v183
      %v376 = vunpack.c.l.b16 %v184
      %v377 = vunpack.c.l.b16 %v185
      %v378 = vunpack.c.l.b16 %v186
      %v379 = vunpack.c.l.b16 %v187
      %v380 = vunpack.c.l.b16 %v188
      %v381 = vunpack.c.l.b16 %v189
      %v382 = vunpack.c.l.b16 %v190
      %v383 = vunpack.c.l.b16 %v191
      %v384 = vunpack.c.l.b16 %v192
      %v385 = vunpack.c.l.b16 %v193
      %v386 = vunpack.c.l.b16 %v194
      %v387 = vunpack.c.l.b16 %v195
      %v388 = vunpack.c.l.b16 %v196
      %v389 = vunpack.c.l.b16 %v197
      %v390 = vunpack.c.l.b16 %v198
      %v391 = vunpack.c.l.b16 %v199
      %v392 = vunpack.c.l.b16 %v200
      %v393 = vunpack.c.l.b16 %v201
      %v394 = vunpack.c.l.b16 %v202
      %v395 = vunpack.c.l.b16 %v203
      %v396 = vunpack.c.l.b16 %v204
      %v397 = vunpack.c.l.b16 %v205
      %v398 = vunpack.c.l.b16 %v206
      %v399 = vunpack.c.l.b16 %v207
      %v400 = vunpack.c.l.b16 %v208
      %v401 = vunpack.c.l.b16 %v209
      %v402 = vunpack.c.l.b16 %v210
      %v403 = vunpack.c.l.b16 %v211
      %v404 = vunpack.c.l.b16 %v212
      %v405 = vunpack.c.l.b16 %v213
      %v406 = vunpack.c.l.b16 %v214
      %v407 = vunpack.c.l.b16 %v215
      %v408 = vunpack.c.l.b16 %v216
      %v409 = vunpack.c.l.b16 %v217
      %v410 = vunpack.c.l.b16 %v218
      %v411 = vunpack.c.l.b16 %v219
      %v412 = vunpack.c.l.b16 %v220
      %v413 = vunpack.c.l.b16 %v221
      %v414 = vunpack.c.l.b16 %v222
      %v415 = vunpack.c.l.b16 %v223
      %v416 = vunpack.c.l.b16 %v224
      %v417 = vunpack.c.l.b16 %v225
      %v418 = vunpack.c.l.b16 %v226
      %v419 = vunpack.c.l.b16 %v227
      %v420 = vunpack.c.l.b16 %v228
      %v421 = vunpack.c.l.b16 %v229
      %v422 = vunpack.c.l.b16 %v230
      %v423 = vunpack.c.l.b16 %v231
      %v424 = vunpack.c.l.b16 %v232
      %v425 = vunpack.c.l.b16 %v233
      %v426 = vunpack.c.l.b16 %v234
      %v427 = vunpack.c.l.b16 %v235
      %v428 = vunpack.c.l.b16 %v236
      %v429 = vunpack.c.l.b16 %v237
      %v430 = vunpack.c.l.b16 %v238
      %v431 = vunpack.c.l.b16 %v239
      %v432 = vpack.c.b16 %v341, %v340
      %v433 = vpack.c.b16 %v343, %v342
      %v434 = vpack.c.b16 %v345, %v344
      %v435 = vpack.c.b16 %v347, %v346
      %v436 = vpack.c.b16 %v349, %v348
      %v437 = vpack.c.b16 %v351, %v350
      %v438 = vpack.c.b16 %v353, %v352
      %v439 = vpack.c.b16 %v355, %v354
      %v440 = vpack.c.b16 %v357, %v356
      %v441 = vpack.c.b16 %v359, %v358
      %v442 = vpack.c.b16 %v361, %v360
      %v443 = vpack.c.b16 %v363, %v362
      %v444 = vpack.c.b16 %v365, %v364
      %v445 = vpack.c.b16 %v367, %v366
      %v446 = vpack.c.b16 %v369, %v368
      %v447 = vpack.c.b16 %v371, %v370
      %v448 = vpack.c.b16 %v373, %v372
      %v449 = vpack.c.b16 %v375, %v374
      %v450 = vpack.c.b16 %v377, %v376
      %v451 = vpack.c.b16 %v379, %v378
      %v452 = vpack.c.b16 %v381, %v380
      %v453 = vpack.c.b16 %v383, %v382
      %v454 = vpack.c.b16 %v385, %v384
      %v455 = vpack.c.b16 %v387, %v386
      %v456 = vpack.c.b16 %v389, %v388
      %v457 = vpack.c.b16 %v391, %v390
      %v458 = vpack.c.b16 %v393, %v392
      %v459 = vpack.c.b16 %v395, %v394
      %v460 = vpack.c.b16 %v397, %v396
      %v461 = vpack.c.b16 %v399, %v398
      %v462 = vpack.c.b16 %v401, %v400
      %v463 = vpack.c.b16 %v403, %v402
      %v464 = vpack.c.b16 %v405, %v404
      %v465 = vpack.c.b16 %v407, %v406
      %v466 = vpack.c.b16 %v409, %v408
      %v467 = vpack.c.b16 %v411, %v410
      %v468 = vpack.c.b16 %v413, %v412
      %v469 = vpack.c.b16 %v415, %v414
      %v470 = vpack.c.b16 %v417, %v416
      %v471 = vpack.c.b16 %v419, %v418
      %v472 = vpack.c.b16 %v421, %v420
      %v473 = vpack.c.b16 %v423, %v422
      %v474 = vpack.c.b16 %v425, %v424
      %v475 = vpack.c.b16 %v427, %v426
      %v476 = vpack.c.b16 %v429, %v428
      %v477 = vpack.c.b16 %v431, %v430
      %v486 = vunpack.c.l.b16 %v240
      %v487 = vunpack.c.l.b16 %v241
      %v488 = vunpack.c.l.b16 %v242
      %v489 = vunpack.c.l.b16 %v243
      %v490 = vunpack.c.l.b16 %v244
      %v491 = vunpack.c.l.b16 %v245
      %v492 = vunpack.c.l.b16 %v246
      %v493 = vunpack.c.l.b16 %v247
      %v494 = vpack.c.b16 %v487, %v486
      %v495 = vpack.c.b16 %v489, %v488
      %v496 = vpack.c.b16 %v491, %v490
      %v497 = vpack.c.b16 %v493, %v492
      %vm502 = vcmask 523264
      %v504 = vsel %vm502, %v432, 0
      %v507 = vsel %vm502, %v433, 0
      %v510 = vsel %vm502, %v434, 0
      %v513 = vsel %vm502, %v435, 0
      %v516 = vsel %vm502, %v436, 0
      %v519 = vsel %vm502, %v437, 0
      %v522 = vsel %vm502, %v438, 0
      %v525 = vsel %vm502, %v439, 0
      %v528 = vsel %vm502, %v440, 0
      %v531 = vsel %vm502, %v441, 0
      %v534 = vsel %vm502, %v442, 0
      %v537 = vsel %vm502, %v443, 0
      %v540 = vsel %vm502, %v444, 0
      %v543 = vsel %vm502, %v445, 0
      %v546 = vsel %vm502, %v446, 0
      %v549 = vsel %vm502, %v447, 0
      %v552 = vsel %vm502, %v448, 0
      %v555 = vsel %vm502, %v449, 0
      %v558 = vsel %vm502, %v450, 0
      %v561 = vsel %vm502, %v451, 0
      %v564 = vsel %vm502, %v452, 0
      %v567 = vsel %vm502, %v453, 0
      %v570 = vsel %vm502, %v454, 0
      %v573 = vsel %vm502, %v455, 0
      %v576 = vsel %vm502, %v456, 0
      %v579 = vsel %vm502, %v457, 0
      %v582 = vsel %vm502, %v458, 0
      %v585 = vsel %vm502, %v459, 0
      %v588 = vsel %vm502, %v460, 0
      %v591 = vsel %vm502, %v461, 0
      %v594 = vsel %vm502, %v462, 0
      %v597 = vsel %vm502, %v463, 0
      %v600 = vsel %vm502, %v464, 0
      %v603 = vsel %vm502, %v465, 0
      %v606 = vsel %vm502, %v466, 0
      %v609 = vsel %vm502, %v467, 0
      %v612 = vsel %vm502, %v468, 0
      %v615 = vsel %vm502, %v469, 0
      %v618 = vsel %vm502, %v470, 0
      %v621 = vsel %vm502, %v471, 0
      %v624 = vsel %vm502, %v472, 0
      %v627 = vsel %vm502, %v473, 0
      %v630 = vsel %vm502, %v474, 0
      %v633 = vsel %vm502, %v475, 0
      %v636 = vsel %vm502, %v476, 0
      %v639 = vsel %vm502, %v477, 0
      %641 = vmatprep.subr.bf16.mxu0 0
      %642 = vmatpush1.bf16.msra.mxu0 %v494
      %643 = vmatprep.subr.bf16.mxu0 0
      %644 = vmatpush1.bf16.msra.mxu0 %v495
      %645 = vmatprep.subr.bf16.mxu0 0
      %646 = vmatpush1.bf16.msra.mxu0 %v496
      %647 = vmatprep.subr.bf16.mxu0 0
      %648 = vmatpush1.bf16.msra.mxu0 %v497
      %649 = vmatprep.subr.bf16.mxu0 0
      %650 = vmatpush1.bf16.msra.mxu0 0
      %651 = vmatprep.subr.bf16.mxu0 0
      %652 = vmatpush1.bf16.msra.mxu0 0
      %653 = vmatprep.subr.bf16.mxu0 0
      %654 = vmatpush1.bf16.msra.mxu0 0
      %655 = vmatprep.subr.bf16.mxu0 0
      %656 = vmatpush1.bf16.msra.mxu0 0
      %657 = vmatprep.subr.bf16.mxu0 0
      %658 = vmatpush1.bf16.msra.mxu0 0
      %659 = vmatprep.subr.bf16.mxu0 0
      %660 = vmatpush1.bf16.msra.mxu0 0
      %661 = vmatprep.subr.bf16.mxu0 0
      %662 = vmatpush1.bf16.msra.mxu0 0
      %663 = vmatprep.subr.bf16.mxu0 0
      %664 = vmatpush1.bf16.msra.mxu0 0
      %665 = vmatprep.subr.bf16.mxu0 0
      %666 = vmatpush1.bf16.msra.mxu0 0
      %667 = vmatprep.subr.bf16.mxu0 0
      %668 = vmatpush1.bf16.msra.mxu0 0
      %669 = vmatprep.subr.bf16.mxu0 0
      %670 = vmatpush1.bf16.msra.mxu0 0
      %671 = vmatprep.subr.bf16.mxu0 0
      %672 = vmatpush1.bf16.msra.mxu0 0
      %673 = vmatprep.mubr.bf16.mxu0 0
      %674 = vmatmul.mubr.bf16.gmra.mrb[0].mxu0 %v504
      %v675 = vpop.f32.mrb[0].mxu0
      %v676 = vadd.f32 0.0, %v675
      %v677 = vpop.f32.mrb[0].mxu0
      %v678 = vpop.f32.mrb[0].mxu0
      %v679 = vadd.f32 0.0, %v678
      %v680 = vpop.f32.mrb[0].mxu0
      %681 = vmatprep.mubr.bf16.mxu0 0
      %682 = vmatmul.mubr.bf16.gmra.mrb[0].mxu0 %v507
      %v683 = vpop.f32.mrb[0].mxu0
      %v684 = vadd.f32 0.0, %v683
      %v685 = vpop.f32.mrb[0].mxu0
      %v686 = vpop.f32.mrb[0].mxu0
      %v687 = vadd.f32 0.0, %v686
      %v688 = vpop.f32.mrb[0].mxu0
      %689 = vmatprep.mubr.bf16.mxu0 0
      %690 = vmatmul.mubr.bf16.gmra.mrb[0].mxu0 %v510
      %v691 = vpop.f32.mrb[0].mxu0
      %v692 = vadd.f32 0.0, %v691
      %v693 = vpop.f32.mrb[0].mxu0
      %v694 = vpop.f32.mrb[0].mxu0
      %v695 = vadd.f32 0.0, %v694
      %v696 = vpop.f32.mrb[0].mxu0
      %697 = vmatprep.mubr.bf16.mxu0 0
      %698 = vmatmul.mubr.bf16.gmra.mrb[0].mxu0 %v513
      %v699 = vpop.f32.mrb[0].mxu0
      %v700 = vadd.f32 0.0, %v699
      %v701 = vpop.f32.mrb[0].mxu0
      %v702 = vpop.f32.mrb[0].mxu0
      %v703 = vadd.f32 0.0, %v702
      %v704 = vpop.f32.mrb[0].mxu0
      %705 = vmatprep.mubr.bf16.mxu0 0
      %706 = vmatmul.mubr.bf16.gmra.mrb[0].mxu0 %v516
      %v707 = vpop.f32.mrb[0].mxu0
      %v708 = vadd.f32 0.0, %v707
      %v709 = vpop.f32.mrb[0].mxu0
      %v710 = vpop.f32.mrb[0].mxu0
      %v711 = vadd.f32 0.0, %v710
      %v712 = vpop.f32.mrb[0].mxu0
      %713 = vmatprep.mubr.bf16.mxu0 0
      %714 = vmatmul.mubr.bf16.gmra.mrb[0].mxu0 %v519
      %v715 = vpop.f32.mrb[0].mxu0
      %v716 = vadd.f32 0.0, %v715
      %v717 = vpop.f32.mrb[0].mxu0
      %v718 = vpop.f32.mrb[0].mxu0
      %v719 = vadd.f32 0.0, %v718
      %v720 = vpop.f32.mrb[0].mxu0
      %721 = vmatprep.mubr.bf16.mxu0 0
      %722 = vmatmul.mubr.bf16.gmra.mrb[0].mxu0 %v522
      %v723 = vpop.f32.mrb[0].mxu0
      %v724 = vadd.f32 0.0, %v723
      %v725 = vpop.f32.mrb[0].mxu0
      %v726 = vpop.f32.mrb[0].mxu0
      %v727 = vadd.f32 0.0, %v726
      %v728 = vpop.f32.mrb[0].mxu0
      %729 = vmatprep.mubr.bf16.mxu0 0
      %730 = vmatmul.mubr.bf16.gmra.mrb[0].mxu0 %v525
      %v731 = vpop.f32.mrb[0].mxu0
      %v732 = vadd.f32 0.0, %v731
      %v733 = vpop.f32.mrb[0].mxu0
      %v734 = vpop.f32.mrb[0].mxu0
      %v735 = vadd.f32 0.0, %v734
      %v736 = vpop.f32.mrb[0].mxu0
      %737 = vmatprep.mubr.bf16.mxu0 0
      %738 = vmatmul.mubr.bf16.gmra.mrb[0].mxu0 %v528
      %v739 = vpop.f32.mrb[0].mxu0
      %v740 = vadd.f32 0.0, %v739
      %v741 = vpop.f32.mrb[0].mxu0
      %v742 = vpop.f32.mrb[0].mxu0
      %v743 = vadd.f32 0.0, %v742
      %v744 = vpop.f32.mrb[0].mxu0
      %745 = vmatprep.mubr.bf16.mxu0 0
      %746 = vmatmul.mubr.bf16.gmra.mrb[0].mxu0 %v531
      %v747 = vpop.f32.mrb[0].mxu0
      %v748 = vadd.f32 0.0, %v747
      %v749 = vpop.f32.mrb[0].mxu0
      %v750 = vpop.f32.mrb[0].mxu0
      %v751 = vadd.f32 0.0, %v750
      %v752 = vpop.f32.mrb[0].mxu0
      %753 = vmatprep.mubr.bf16.mxu0 0
      %754 = vmatmul.mubr.bf16.gmra.mrb[0].mxu0 %v534
      %v755 = vpop.f32.mrb[0].mxu0
      %v756 = vadd.f32 0.0, %v755
      %v757 = vpop.f32.mrb[0].mxu0
      %v758 = vpop.f32.mrb[0].mxu0
      %v759 = vadd.f32 0.0, %v758
      %v760 = vpop.f32.mrb[0].mxu0
      %761 = vmatprep.mubr.bf16.mxu0 0
      %762 = vmatmul.mubr.bf16.gmra.mrb[0].mxu0 %v537
      %v763 = vpop.f32.mrb[0].mxu0
      %v764 = vadd.f32 0.0, %v763
      %v765 = vpop.f32.mrb[0].mxu0
      %v766 = vpop.f32.mrb[0].mxu0
      %v767 = vadd.f32 0.0, %v766
      %v768 = vpop.f32.mrb[0].mxu0
      %769 = vmatprep.mubr.bf16.mxu0 0
      %770 = vmatmul.mubr.bf16.gmra.mrb[0].mxu0 %v540
      %v771 = vpop.f32.mrb[0].mxu0
      %v772 = vadd.f32 0.0, %v771
      %v773 = vpop.f32.mrb[0].mxu0
      %v774 = vpop.f32.mrb[0].mxu0
      %v775 = vadd.f32 0.0, %v774
      %v776 = vpop.f32.mrb[0].mxu0
      %777 = vmatprep.mubr.bf16.mxu0 0
      %778 = vmatmul.mubr.bf16.gmra.mrb[0].mxu0 %v543
      %v779 = vpop.f32.mrb[0].mxu0
      %v780 = vadd.f32 0.0, %v779
      %v781 = vpop.f32.mrb[0].mxu0
      %v782 = vpop.f32.mrb[0].mxu0
      %v783 = vadd.f32 0.0, %v782
      %v784 = vpop.f32.mrb[0].mxu0
      %785 = vmatprep.mubr.bf16.mxu0 0
      %786 = vmatmul.mubr.bf16.gmra.mrb[0].mxu0 %v546
      %v787 = vpop.f32.mrb[0].mxu0
      %v788 = vadd.f32 0.0, %v787
      %v789 = vpop.f32.mrb[0].mxu0
      %v790 = vpop.f32.mrb[0].mxu0
      %v791 = vadd.f32 0.0, %v790
      %v792 = vpop.f32.mrb[0].mxu0
      %793 = vmatprep.mubr.bf16.mxu0 0
      %794 = vmatmul.mubr.bf16.gmra.mrb[0].mxu0 %v549
      %v795 = vpop.f32.mrb[0].mxu0
      %v796 = vadd.f32 0.0, %v795
      %v797 = vpop.f32.mrb[0].mxu0
      %v798 = vpop.f32.mrb[0].mxu0
      %v799 = vadd.f32 0.0, %v798
      %v800 = vpop.f32.mrb[0].mxu0
      %801 = vmatprep.mubr.bf16.mxu0 0
      %802 = vmatmul.mubr.bf16.gmra.mrb[0].mxu0 %v552
      %v803 = vpop.f32.mrb[0].mxu0
      %v804 = vadd.f32 0.0, %v803
      %v805 = vpop.f32.mrb[0].mxu0
      %v806 = vpop.f32.mrb[0].mxu0
      %v807 = vadd.f32 0.0, %v806
      %v808 = vpop.f32.mrb[0].mxu0
      %809 = vmatprep.mubr.bf16.mxu0 0
      %810 = vmatmul.mubr.bf16.gmra.mrb[0].mxu0 %v555
      %v811 = vpop.f32.mrb[0].mxu0
      %v812 = vadd.f32 0.0, %v811
      %v813 = vpop.f32.mrb[0].mxu0
      %v814 = vpop.f32.mrb[0].mxu0
      %v815 = vadd.f32 0.0, %v814
      %v816 = vpop.f32.mrb[0].mxu0
      %817 = vmatprep.mubr.bf16.mxu0 0
      %818 = vmatmul.mubr.bf16.gmra.mrb[0].mxu0 %v558
      %v819 = vpop.f32.mrb[0].mxu0
      %v820 = vadd.f32 0.0, %v819
      %v821 = vpop.f32.mrb[0].mxu0
      %v822 = vpop.f32.mrb[0].mxu0
      %v823 = vadd.f32 0.0, %v822
      %v824 = vpop.f32.mrb[0].mxu0
      %825 = vmatprep.mubr.bf16.mxu0 0
      %826 = vmatmul.mubr.bf16.gmra.mrb[0].mxu0 %v561
      %v827 = vpop.f32.mrb[0].mxu0
      %v828 = vadd.f32 0.0, %v827
      %v829 = vpop.f32.mrb[0].mxu0
      %v830 = vpop.f32.mrb[0].mxu0
      %v831 = vadd.f32 0.0, %v830
      %v832 = vpop.f32.mrb[0].mxu0
      %833 = vmatprep.mubr.bf16.mxu0 0
      %834 = vmatmul.mubr.bf16.gmra.mrb[0].mxu0 %v564
      %v835 = vpop.f32.mrb[0].mxu0
      %v836 = vadd.f32 0.0, %v835
      %v837 = vpop.f32.mrb[0].mxu0
      %v838 = vpop.f32.mrb[0].mxu0
      %v839 = vadd.f32 0.0, %v838
      %v840 = vpop.f32.mrb[0].mxu0
      %841 = vmatprep.mubr.bf16.mxu0 0
      %842 = vmatmul.mubr.bf16.gmra.mrb[0].mxu0 %v567
      %v843 = vpop.f32.mrb[0].mxu0
      %v844 = vadd.f32 0.0, %v843
      %v845 = vpop.f32.mrb[0].mxu0
      %v846 = vpop.f32.mrb[0].mxu0
      %v847 = vadd.f32 0.0, %v846
      %v848 = vpop.f32.mrb[0].mxu0
      %849 = vmatprep.mubr.bf16.mxu0 0
      %850 = vmatmul.mubr.bf16.gmra.mrb[0].mxu0 %v570
      %v851 = vpop.f32.mrb[0].mxu0
      %v852 = vadd.f32 0.0, %v851
      %v853 = vpop.f32.mrb[0].mxu0
      %v854 = vpop.f32.mrb[0].mxu0
      %v855 = vadd.f32 0.0, %v854
      %v856 = vpop.f32.mrb[0].mxu0
      %857 = vmatprep.mubr.bf16.mxu0 0
      %858 = vmatmul.mubr.bf16.gmra.mrb[0].mxu0 %v573
      %v859 = vpop.f32.mrb[0].mxu0
      %v860 = vadd.f32 0.0, %v859
      %v861 = vpop.f32.mrb[0].mxu0
      %v862 = vpop.f32.mrb[0].mxu0
      %v863 = vadd.f32 0.0, %v862
      %v864 = vpop.f32.mrb[0].mxu0
      %865 = vmatprep.mubr.bf16.mxu0 0
      %866 = vmatmul.mubr.bf16.gmra.mrb[0].mxu0 %v576
      %v867 = vpop.f32.mrb[0].mxu0
      %v868 = vadd.f32 0.0, %v867
      %v869 = vpop.f32.mrb[0].mxu0
      %v870 = vpop.f32.mrb[0].mxu0
      %v871 = vadd.f32 0.0, %v870
      %v872 = vpop.f32.mrb[0].mxu0
      %873 = vmatprep.mubr.bf16.mxu0 0
      %874 = vmatmul.mubr.bf16.gmra.mrb[0].mxu0 %v579
      %v875 = vpop.f32.mrb[0].mxu0
      %v876 = vadd.f32 0.0, %v875
      %v877 = vpop.f32.mrb[0].mxu0
      %v878 = vpop.f32.mrb[0].mxu0
      %v879 = vadd.f32 0.0, %v878
      %v880 = vpop.f32.mrb[0].mxu0
      %881 = vmatprep.mubr.bf16.mxu0 0
      %882 = vmatmul.mubr.bf16.gmra.mrb[0].mxu0 %v582
      %v883 = vpop.f32.mrb[0].mxu0
      %v884 = vadd.f32 0.0, %v883
      %v885 = vpop.f32.mrb[0].mxu0
      %v886 = vpop.f32.mrb[0].mxu0
      %v887 = vadd.f32 0.0, %v886
      %v888 = vpop.f32.mrb[0].mxu0
      %889 = vmatprep.mubr.bf16.mxu0 0
      %890 = vmatmul.mubr.bf16.gmra.mrb[0].mxu0 %v585
      %v891 = vpop.f32.mrb[0].mxu0
      %v892 = vadd.f32 0.0, %v891
      %v893 = vpop.f32.mrb[0].mxu0
      %v894 = vpop.f32.mrb[0].mxu0
      %v895 = vadd.f32 0.0, %v894
      %v896 = vpop.f32.mrb[0].mxu0
      %897 = vmatprep.mubr.bf16.mxu0 0
      %898 = vmatmul.mubr.bf16.gmra.mrb[0].mxu0 %v588
      %v899 = vpop.f32.mrb[0].mxu0
      %v900 = vadd.f32 0.0, %v899
      %v901 = vpop.f32.mrb[0].mxu0
      %v902 = vpop.f32.mrb[0].mxu0
      %v903 = vadd.f32 0.0, %v902
      %v904 = vpop.f32.mrb[0].mxu0
      %905 = vmatprep.mubr.bf16.mxu0 0
      %906 = vmatmul.mubr.bf16.gmra.mrb[0].mxu0 %v591
      %v907 = vpop.f32.mrb[0].mxu0
      %v908 = vadd.f32 0.0, %v907
      %v909 = vpop.f32.mrb[0].mxu0
      %v910 = vpop.f32.mrb[0].mxu0
      %v911 = vadd.f32 0.0, %v910
      %v912 = vpop.f32.mrb[0].mxu0
      %913 = vmatprep.mubr.bf16.mxu0 0
      %914 = vmatmul.mubr.bf16.gmra.mrb[0].mxu0 %v594
      %v915 = vpop.f32.mrb[0].mxu0
      %v916 = vadd.f32 0.0, %v915
      %v917 = vpop.f32.mrb[0].mxu0
      %v918 = vpop.f32.mrb[0].mxu0
      %v919 = vadd.f32 0.0, %v918
      %v920 = vpop.f32.mrb[0].mxu0
      %921 = vmatprep.mubr.bf16.mxu0 0
      %922 = vmatmul.mubr.bf16.gmra.mrb[0].mxu0 %v597
      %v923 = vpop.f32.mrb[0].mxu0
      %v924 = vadd.f32 0.0, %v923
      %v925 = vpop.f32.mrb[0].mxu0
      %v926 = vpop.f32.mrb[0].mxu0
      %v927 = vadd.f32 0.0, %v926
      %v928 = vpop.f32.mrb[0].mxu0
      %929 = vmatprep.mubr.bf16.mxu0 0
      %930 = vmatmul.mubr.bf16.gmra.mrb[0].mxu0 %v600
      %v931 = vpop.f32.mrb[0].mxu0
      %v932 = vadd.f32 0.0, %v931
      %v933 = vpop.f32.mrb[0].mxu0
      %v934 = vpop.f32.mrb[0].mxu0
      %v935 = vadd.f32 0.0, %v934
      %v936 = vpop.f32.mrb[0].mxu0
      %937 = vmatprep.mubr.bf16.mxu0 0
      %938 = vmatmul.mubr.bf16.gmra.mrb[0].mxu0 %v603
      %v939 = vpop.f32.mrb[0].mxu0
      %v940 = vadd.f32 0.0, %v939
      %v941 = vpop.f32.mrb[0].mxu0
      %v942 = vpop.f32.mrb[0].mxu0
      %v943 = vadd.f32 0.0, %v942
      %v944 = vpop.f32.mrb[0].mxu0
      %945 = vmatprep.mubr.bf16.mxu0 0
      %946 = vmatmul.mubr.bf16.gmra.mrb[0].mxu0 %v606
      %v947 = vpop.f32.mrb[0].mxu0
      %v948 = vadd.f32 0.0, %v947
      %v949 = vpop.f32.mrb[0].mxu0
      %v950 = vpop.f32.mrb[0].mxu0
      %v951 = vadd.f32 0.0, %v950
      %v952 = vpop.f32.mrb[0].mxu0
      %953 = vmatprep.mubr.bf16.mxu0 0
      %954 = vmatmul.mubr.bf16.gmra.mrb[0].mxu0 %v609
      %v955 = vpop.f32.mrb[0].mxu0
      %v956 = vadd.f32 0.0, %v955
      %v957 = vpop.f32.mrb[0].mxu0
      %v958 = vpop.f32.mrb[0].mxu0
      %v959 = vadd.f32 0.0, %v958
      %v960 = vpop.f32.mrb[0].mxu0
      %961 = vmatprep.mubr.bf16.mxu0 0
      %962 = vmatmul.mubr.bf16.gmra.mrb[0].mxu0 %v612
      %v963 = vpop.f32.mrb[0].mxu0
      %v964 = vadd.f32 0.0, %v963
      %v965 = vpop.f32.mrb[0].mxu0
      %v966 = vpop.f32.mrb[0].mxu0
      %v967 = vadd.f32 0.0, %v966
      %v968 = vpop.f32.mrb[0].mxu0
      %969 = vmatprep.mubr.bf16.mxu0 0
      %970 = vmatmul.mubr.bf16.gmra.mrb[0].mxu0 %v615
      %v971 = vpop.f32.mrb[0].mxu0
      %v972 = vadd.f32 0.0, %v971
      %v973 = vpop.f32.mrb[0].mxu0
      %v974 = vpop.f32.mrb[0].mxu0
      %v975 = vadd.f32 0.0, %v974
      %v976 = vpop.f32.mrb[0].mxu0
      %977 = vmatprep.mubr.bf16.mxu0 0
      %978 = vmatmul.mubr.bf16.gmra.mrb[0].mxu0 %v618
      %v979 = vpop.f32.mrb[0].mxu0
      %v980 = vadd.f32 0.0, %v979
      %v981 = vpop.f32.mrb[0].mxu0
      %v982 = vpop.f32.mrb[0].mxu0
      %v983 = vadd.f32 0.0, %v982
      %v984 = vpop.f32.mrb[0].mxu0
      %985 = vmatprep.mubr.bf16.mxu0 0
      %986 = vmatmul.mubr.bf16.gmra.mrb[0].mxu0 %v621
      %v987 = vpop.f32.mrb[0].mxu0
      %v988 = vadd.f32 0.0, %v987
      %v989 = vpop.f32.mrb[0].mxu0
      %v990 = vpop.f32.mrb[0].mxu0
      %v991 = vadd.f32 0.0, %v990
      %v992 = vpop.f32.mrb[0].mxu0
      %993 = vmatprep.mubr.bf16.mxu0 0
      %994 = vmatmul.mubr.bf16.gmra.mrb[0].mxu0 %v624
      %v995 = vpop.f32.mrb[0].mxu0
      %v996 = vadd.f32 0.0, %v995
      %v997 = vpop.f32.mrb[0].mxu0
      %v998 = vpop.f32.mrb[0].mxu0
      %v999 = vadd.f32 0.0, %v998
      %v1000 = vpop.f32.mrb[0].mxu0
      %1001 = vmatprep.mubr.bf16.mxu0 0
      %1002 = vmatmul.mubr.bf16.gmra.mrb[0].mxu0 %v627
      %v1003 = vpop.f32.mrb[0].mxu0
      %v1004 = vadd.f32 0.0, %v1003
      %v1005 = vpop.f32.mrb[0].mxu0
      %v1006 = vpop.f32.mrb[0].mxu0
      %v1007 = vadd.f32 0.0, %v1006
      %v1008 = vpop.f32.mrb[0].mxu0
      %1009 = vmatprep.mubr.bf16.mxu0 0
      %1010 = vmatmul.mubr.bf16.gmra.mrb[0].mxu0 %v630
      %v1011 = vpop.f32.mrb[0].mxu0
      %v1012 = vadd.f32 0.0, %v1011
      %v1013 = vpop.f32.mrb[0].mxu0
      %v1014 = vpop.f32.mrb[0].mxu0
      %v1015 = vadd.f32 0.0, %v1014
      %v1016 = vpop.f32.mrb[0].mxu0
      %1017 = vmatprep.mubr.bf16.mxu0 0
      %1018 = vmatmul.mubr.bf16.gmra.mrb[0].mxu0 %v633
      %v1019 = vpop.f32.mrb[0].mxu0
      %v1020 = vadd.f32 0.0, %v1019
      %v1021 = vpop.f32.mrb[0].mxu0
      %v1022 = vpop.f32.mrb[0].mxu0
      %v1023 = vadd.f32 0.0, %v1022
      %v1024 = vpop.f32.mrb[0].mxu0
      %1025 = vmatprep.mubr.bf16.mxu0 0
      %1026 = vmatmul.mubr.bf16.gmra.mrb[0].mxu0 %v636
      %v1027 = vpop.f32.mrb[0].mxu0
      %v1028 = vadd.f32 0.0, %v1027
      %v1029 = vpop.f32.mrb[0].mxu0
      %v1030 = vpop.f32.mrb[0].mxu0
      %v1031 = vadd.f32 0.0, %v1030
      %v1032 = vpop.f32.mrb[0].mxu0
      %1033 = vmatprep.mubr.bf16.mxu0 0
      %1034 = vmatmul.mubr.bf16.gmra.mrb[0].mxu0 %v639
      %v1035 = vpop.f32.mrb[0].mxu0
      %v1036 = vadd.f32 0.0, %v1035
      %v1037 = vpop.f32.mrb[0].mxu0
      %v1038 = vpop.f32.mrb[0].mxu0
      %v1039 = vadd.f32 0.0, %v1038
      %v1040 = vpop.f32.mrb[0].mxu0
      %1041 = vdwg.mxu0
      %v1042 = vtanh.pop %v676
      %v1043 = vtanh.pop %v679
      %v1044 = vtanh.pop %v684
      %v1045 = vtanh.pop %v687
      %v1046 = vtanh.pop %v692
      %v1047 = vtanh.pop %v695
      %v1048 = vtanh.pop %v700
      %v1049 = vtanh.pop %v703
      %v1050 = vtanh.pop %v708
      %v1051 = vtanh.pop %v711
      %v1052 = vtanh.pop %v716
      %v1053 = vtanh.pop %v719
      %v1054 = vtanh.pop %v724
      %v1055 = vtanh.pop %v727
      %v1056 = vtanh.pop %v732
      %v1057 = vtanh.pop %v735
      %v1058 = vtanh.pop %v740
      %v1059 = vtanh.pop %v743
      %v1060 = vtanh.pop %v748
      %v1061 = vtanh.pop %v751
      %v1062 = vtanh.pop %v756
      %v1063 = vtanh.pop %v759
      %v1064 = vtanh.pop %v764
      %v1065 = vtanh.pop %v767
      %v1066 = vtanh.pop %v772
      %v1067 = vtanh.pop %v775
      %v1068 = vtanh.pop %v780
      %v1069 = vtanh.pop %v783
      %v1070 = vtanh.pop %v788
      %v1071 = vtanh.pop %v791
      %v1072 = vtanh.pop %v796
      %v1073 = vtanh.pop %v799
      %v1074 = vtanh.pop %v804
      %v1075 = vtanh.pop %v807
      %v1076 = vtanh.pop %v812
      %v1077 = vtanh.pop %v815
      %v1078 = vtanh.pop %v820
      %v1079 = vtanh.pop %v823
      %v1080 = vtanh.pop %v828
      %v1081 = vtanh.pop %v831
      %v1082 = vtanh.pop %v836
      %v1083 = vtanh.pop %v839
      %v1084 = vtanh.pop %v844
      %v1085 = vtanh.pop %v847
      %v1086 = vtanh.pop %v852
      %v1087 = vtanh.pop %v855
      %v1088 = vtanh.pop %v860
      %v1089 = vtanh.pop %v863
      %v1090 = vtanh.pop %v868
      %v1091 = vtanh.pop %v871
      %v1092 = vtanh.pop %v876
      %v1093 = vtanh.pop %v879
      %v1094 = vtanh.pop %v884
      %v1095 = vtanh.pop %v887
      %v1096 = vtanh.pop %v892
      %v1097 = vtanh.pop %v895
      %v1098 = vtanh.pop %v900
      %v1099 = vtanh.pop %v903
      %v1100 = vtanh.pop %v908
      %v1101 = vtanh.pop %v911
      %v1102 = vtanh.pop %v916
      %v1103 = vtanh.pop %v919
      %v1104 = vtanh.pop %v924
      %v1105 = vtanh.pop %v927
      %v1106 = vtanh.pop %v932
      %v1107 = vtanh.pop %v935
      %v1108 = vtanh.pop %v940
      %v1109 = vtanh.pop %v943
      %v1110 = vtanh.pop %v948
      %v1111 = vtanh.pop %v951
      %v1112 = vtanh.pop %v956
      %v1113 = vtanh.pop %v959
      %v1114 = vtanh.pop %v964
      %v1115 = vtanh.pop %v967
      %v1116 = vtanh.pop %v972
      %v1117 = vtanh.pop %v975
      %v1118 = vtanh.pop %v980
      %v1119 = vtanh.pop %v983
      %v1120 = vtanh.pop %v988
      %v1121 = vtanh.pop %v991
      %v1122 = vtanh.pop %v996
      %v1123 = vtanh.pop %v999
      %v1124 = vtanh.pop %v1004
      %v1125 = vtanh.pop %v1007
      %v1126 = vtanh.pop %v1012
      %v1127 = vtanh.pop %v1015
      %v1128 = vtanh.pop %v1020
      %v1129 = vtanh.pop %v1023
      %v1130 = vtanh.pop %v1028
      %v1131 = vtanh.pop %v1031
      %v1132 = vtanh.pop %v1036
      %v1133 = vtanh.pop %v1039
      %1134 = vst [vmem:[%s145] sm:$0xff] %v1042
      %1135 = vst [vmem:[%s145 + $0x8] sm:$0xff] %v1043
      %1136 = vst [vmem:[%s145 + $0x10] sm:$0xff] %v1044
      %1137 = vst [vmem:[%s145 + $0x18] sm:$0xff] %v1045
      %1138 = vst [vmem:[%s145 + $0x20] sm:$0xff] %v1046
      %1139 = vst [vmem:[%s145 + $0x28] sm:$0xff] %v1047
      %1140 = vst [vmem:[%s145 + $0x30] sm:$0xff] %v1048
      %1141 = vst [vmem:[%s145 + $0x38] sm:$0xff] %v1049
      %1142 = vst [vmem:[%s145 + $0x40] sm:$0xff] %v1050
      %1143 = vst [vmem:[%s145 + $0x48] sm:$0xff] %v1051
      %1144 = vst [vmem:[%s145 + $0x50] sm:$0xff] %v1052
      %1145 = vst [vmem:[%s145 + $0x58] sm:$0xff] %v1053
      %1146 = vst [vmem:[%s145 + $0x60] sm:$0xff] %v1054
      %1147 = vst [vmem:[%s145 + $0x68] sm:$0xff] %v1055
      %1148 = vst [vmem:[%s145 + $0x70] sm:$0xff] %v1056
      %1149 = vst [vmem:[%s145 + $0x78] sm:$0xff] %v1057
      %1150 = vst [vmem:[%s145 + $0x80] sm:$0xff] %v1058
      %1151 = vst [vmem:[%s145 + $0x88] sm:$0xff] %v1059
      %1152 = vst [vmem:[%s145 + $0x90] sm:$0xff] %v1060
      %1153 = vst [vmem:[%s145 + $0x98] sm:$0xff] %v1061
      %1154 = vst [vmem:[%s145 + $0xa0] sm:$0xff] %v1062
      %1155 = vst [vmem:[%s145 + $0xa8] sm:$0xff] %v1063
      %1156 = vst [vmem:[%s145 + $0xb0] sm:$0xff] %v1064
      %1157 = vst [vmem:[%s145 + $0xb8] sm:$0xff] %v1065
      %1158 = vst [vmem:[%s145 + $0xc0] sm:$0xff] %v1066
      %1159 = vst [vmem:[%s145 + $0xc8] sm:$0xff] %v1067
      %1160 = vst [vmem:[%s145 + $0xd0] sm:$0xff] %v1068
      %1161 = vst [vmem:[%s145 + $0xd8] sm:$0xff] %v1069
      %1162 = vst [vmem:[%s145 + $0xe0] sm:$0xff] %v1070
      %1163 = vst [vmem:[%s145 + $0xe8] sm:$0xff] %v1071
      %1164 = vst [vmem:[%s145 + $0xf0] sm:$0xff] %v1072
      %1165 = vst [vmem:[%s145 + $0xf8] sm:$0xff] %v1073
      %1166 = vst [vmem:[%s145 + $0x100] sm:$0xff] %v1074
      %1167 = vst [vmem:[%s145 + $0x108] sm:$0xff] %v1075
      %1168 = vst [vmem:[%s145 + $0x110] sm:$0xff] %v1076
      %1169 = vst [vmem:[%s145 + $0x118] sm:$0xff] %v1077
      %1170 = vst [vmem:[%s145 + $0x120] sm:$0xff] %v1078
      %1171 = vst [vmem:[%s145 + $0x128] sm:$0xff] %v1079
      %1172 = vst [vmem:[%s145 + $0x130] sm:$0xff] %v1080
      %1173 = vst [vmem:[%s145 + $0x138] sm:$0xff] %v1081
      %1174 = vst [vmem:[%s145 + $0x140] sm:$0xff] %v1082
      %1175 = vst [vmem:[%s145 + $0x148] sm:$0xff] %v1083
      %1176 = vst [vmem:[%s145 + $0x150] sm:$0xff] %v1084
      %1177 = vst [vmem:[%s145 + $0x158] sm:$0xff] %v1085
      %1178 = vst [vmem:[%s145 + $0x160] sm:$0xff] %v1086
      %1179 = vst [vmem:[%s145 + $0x168] sm:$0xff] %v1087
      %1180 = vst [vmem:[%s145 + $0x170] sm:$0xff] %v1088
      %1181 = vst [vmem:[%s145 + $0x178] sm:$0xff] %v1089
      %1182 = vst [vmem:[%s145 + $0x180] sm:$0xff] %v1090
      %1183 = vst [vmem:[%s145 + $0x188] sm:$0xff] %v1091
      %1184 = vst [vmem:[%s145 + $0x190] sm:$0xff] %v1092
      %1185 = vst [vmem:[%s145 + $0x198] sm:$0xff] %v1093
      %1186 = vst [vmem:[%s145 + $0x1a0] sm:$0xff] %v1094
      %1187 = vst [vmem:[%s145 + $0x1a8] sm:$0xff] %v1095
      %1188 = vst [vmem:[%s145 + $0x1b0] sm:$0xff] %v1096
      %1189 = vst [vmem:[%s145 + $0x1b8] sm:$0xff] %v1097
      %1190 = vst [vmem:[%s145 + $0x1c0] sm:$0xff] %v1098
      %1191 = vst [vmem:[%s145 + $0x1c8] sm:$0xff] %v1099
      %1192 = vst [vmem:[%s145 + $0x1d0] sm:$0xff] %v1100
      %1193 = vst [vmem:[%s145 + $0x1d8] sm:$0xff] %v1101
      %1194 = vst [vmem:[%s145 + $0x1e0] sm:$0xff] %v1102
      %1195 = vst [vmem:[%s145 + $0x1e8] sm:$0xff] %v1103
      %1196 = vst [vmem:[%s145 + $0x1f0] sm:$0xff] %v1104
      %1197 = vst [vmem:[%s145 + $0x1f8] sm:$0xff] %v1105
      %1198 = vst [vmem:[%s145 + $0x200] sm:$0xff] %v1106
      %1199 = vst [vmem:[%s145 + $0x208] sm:$0xff] %v1107
      %1200 = vst [vmem:[%s145 + $0x210] sm:$0xff] %v1108
      %1201 = vst [vmem:[%s145 + $0x218] sm:$0xff] %v1109
      %1202 = vst [vmem:[%s145 + $0x220] sm:$0xff] %v1110
      %1203 = vst [vmem:[%s145 + $0x228] sm:$0xff] %v1111
      %1204 = vst [vmem:[%s145 + $0x230] sm:$0xff] %v1112
      %1205 = vst [vmem:[%s145 + $0x238] sm:$0xff] %v1113
      %1206 = vst [vmem:[%s145 + $0x240] sm:$0xff] %v1114
      %1207 = vst [vmem:[%s145 + $0x248] sm:$0xff] %v1115
      %1208 = vst [vmem:[%s145 + $0x250] sm:$0xff] %v1116
      %1209 = vst [vmem:[%s145 + $0x258] sm:$0xff] %v1117
      %1210 = vst [vmem:[%s145 + $0x260] sm:$0xff] %v1118
      %1211 = vst [vmem:[%s145 + $0x268] sm:$0xff] %v1119
      %1212 = vst [vmem:[%s145 + $0x270] sm:$0xff] %v1120
      %1213 = vst [vmem:[%s145 + $0x278] sm:$0xff] %v1121
      %1214 = vst [vmem:[%s145 + $0x280] sm:$0xff] %v1122
      %1215 = vst [vmem:[%s145 + $0x288] sm:$0xff] %v1123
      %1216 = vst [vmem:[%s145 + $0x290] sm:$0xff] %v1124
      %1217 = vst [vmem:[%s145 + $0x298] sm:$0xff] %v1125
      %1218 = vst [vmem:[%s145 + $0x2a0] sm:$0xff] %v1126
      %1219 = vst [vmem:[%s145 + $0x2a8] sm:$0xff] %v1127
      %1220 = vst [vmem:[%s145 + $0x2b0] sm:$0xff] %v1128
      %1221 = vst [vmem:[%s145 + $0x2b8] sm:$0xff] %v1129
      %1222 = vst [vmem:[%s145 + $0x2c0] sm:$0xff] %v1130
      %1223 = vst [vmem:[%s145 + $0x2c8] sm:$0xff] %v1131
      %1224 = vst [vmem:[%s145 + $0x2d0] sm:$0xff] %v1132
      %1225 = vst [vmem:[%s145 + $0x2d8] sm:$0xff] %v1133
      %s1226 = smul.u32 92, %s13
      %p1227 = scmp.lt.s32.totalorder %s1226, 275
      %s1228 = scalar_select %p1227, %s1226, 275
      %s1229 = smul.addr %s1228, 8
      %s1230 = scalar_lea.vmem %s2, %s1229
      // Predicated region
      $region29: #{dc_generator_forward.7} parent=27 // pred_check
        %p1231 = pneg %p78
      $region30: #{dc_generator_forward.7} parent=27 // pred_check_branch
        %1233 = sbr.rel (%p1231) target = $region32
      $region31: #{dc_generator_forward.7} parent=27 // pred_region
        %s1234 = smul.u32 92, %s13
      $region32: #{dc_generator_forward.7} parent=27 // pred_fallthru
        _
    $region28: #{dc_generator_forward.7} parent=5 // pred_fallthru
      _
    %p1235 = scmp.le.s32.totalorder 2, %s8
    // Predicated region
    $region33: #{dc_generator_forward.7} parent=5 // pred_check
      %p1236 = pneg %p1235
    $region34: #{dc_generator_forward.7} parent=5 // pred_check_branch
      %1238 = sbr.rel (%p1236) target = $region36
    $region35: #{dc_generator_forward.7} parent=5 // pred_region
      %s1239 = ssub.s32 %s8, 2
      // Predicated region
      $region37: #{dc_generator_forward.7} parent=35 // pred_check
        %p1240 = pneg %p84
      $region38: #{dc_generator_forward.7} parent=35 // pred_check_branch
        %1242 = sbr.rel (%p1240) target = $region40
      $region39: #{dc_generator_forward.7} parent=35 // pred_region
        %s1243 = smul.u32 92, %s14
        %p1244 = scmp.lt.s32.totalorder %s1243, 275
        %s1245 = scalar_select %p1244, %s1243, 275
        %s1246 = smul.addr %s1245, 8
        %s1247 = scalar_lea.vmem %s2, %s1246
      $region40: #{dc_generator_forward.7} parent=35 // pred_fallthru
        _
    $region36: #{dc_generator_forward.7} parent=5 // pred_fallthru
      _
  $region6: #{dc_generator_forward.7} parent=0 // loop_footer
    %s12 = sadd.s32 1, %s8
  $region7: #{dc_generator_forward.7} parent=0 // loop_footer_branch
    %7 = sbr.rel target = $region3
  $region8: #{dc_generator_forward.7} parent=0 // loop_exit
    _

</llo_original>
